<compile_context>
chip_gen: v6e
topology: v6e:2x2x1
jax: 0.10.0
libtpu: 0.0.40
codegen_flags: <defaults>
</compile_context>

<pallas_src>
import jax
import jax.numpy as jnp
from jax.experimental import pallas as pl
from jax.experimental.pallas import tpu as pltpu


def rsnet_kernel(x_ref, w1_ref, b1_ref, w2_ref, b2_ref,
                 w3_ref, b3_ref, w4_ref, b4_ref, o_ref):
    # Feature-major: x is (8, TB) bf16 (rows 0..5 = features, rows 6..7 zero pad).
    x = x_ref[...]                                             # (8,  TB) bf16

    # fc1: (256, 8) @ (8, TB) -> (256, TB), f32 accumulation on the MXU.
    h1 = jnp.dot(w1_ref[...], x, preferred_element_type=jnp.float32)
    h1 = jnp.maximum(h1 + b1_ref[...], 0.0).astype(jnp.bfloat16)

    # fc2: (128, 256) @ (256, TB) -> (128, TB)
    h2 = jnp.dot(w2_ref[...], h1, preferred_element_type=jnp.float32)
    h2 = jnp.maximum(h2 + b2_ref[...], 0.0).astype(jnp.bfloat16)

    # fc3: (64, 128) @ (128, TB) -> (64, TB); keep f32 for the final reduction.
    h3 = jnp.dot(w3_ref[...], h2, preferred_element_type=jnp.float32)
    h3 = jnp.maximum(h3 + b3_ref[...], 0.0)

    # fc4 (64 -> 1) on the VPU/XLU: broadcast multiply + sublane reduce; an MXU
    # matmul with N=1 would waste 255/256 of the array.  Result is lane-dense
    # (1, TB), so the store is an unmasked full-lane write.
    h4 = jnp.sum(h3 * w4_ref[...], axis=0, keepdims=True) + b4_ref[...]
    o_ref[...] = (jnp.tanh(h4) * 0.5 + 0.5).astype(o_ref.dtype)


def rsnet_forward(x, params, *, batch_tile=256):
    """x: (B, 6) float32 -> (B, 1) float32."""
    B = x.shape[0]
    TB = batch_tile
    n_steps = pl.cdiv(B, TB)
    Bp = n_steps * TB

    # Feature-major, bf16, zero-padded input: (8, Bp); rows 0..5 hold x.T.
    xT = jnp.zeros((8, Bp), jnp.bfloat16)
    xT = xT.at[:6, :B].set(x.T.astype(jnp.bfloat16))

    w1, b1 = params["w1"], params["b1"]
    w2, b2 = params["w2"], params["b2"]
    w3, b3 = params["w3"], params["b3"]
    w4, b4 = params["w4"], params["b4"]

    def resident(a):
        # Same block index on every grid step -> stays resident in VMEM (no re-DMA).
        return pl.BlockSpec(a.shape, lambda i: (0, 0))

    out = pl.pallas_call(
        rsnet_kernel,
        out_shape=jax.ShapeDtypeStruct((1, Bp), jnp.float32),
        grid=(n_steps,),
        in_specs=[
            pl.BlockSpec((8, TB), lambda i: (0, i)),      # x tile follows the grid
            resident(w1), resident(b1),
            resident(w2), resident(b2),
            resident(w3), resident(b3),
            resident(w4), resident(b4),
        ],
        out_specs=pl.BlockSpec((1, TB), lambda i: (0, i)),
        compiler_params=pltpu.CompilerParams(
            dimension_semantics=("parallel",),            # megacore split on v7x
            vmem_limit_bytes=32 * 1024 * 1024,
        ),
    )(xT, w1, b1, w2, b2, w3, b3, w4, b4)

    # (1, Bp) lane-dense row -> (B, 1); this reshape/slice is free layout plumbing.
    return out[0, :B].reshape(B, 1)


def init_params(key):
    """Mirrors the PyTorch RSNet __init__:
      fc1..fc3 weights: uniform(-1/sqrt(fan_in), 1/sqrt(fan_in))   (fanin_init)
      fc4 weight:       uniform(-EPS, EPS), EPS = 0.003
      all biases:       PyTorch Linear default uniform(-1/sqrt(fan_in), ...)
    Weights are stored feature-major (out_features, in_features) like PyTorch;
    fc1's input dim is zero-padded 6 -> 8, fc4's weight is kept as a (64, 1)
    column for the in-kernel VPU reduction.  Matmul weights are bf16, biases f32.
    """
    EPS = 0.003
    k = jax.random.split(key, 8)

    def u(kk, shape, bound):
        return jax.random.uniform(kk, shape, jnp.float32, -bound, bound)

    b1v, b2v, b3v, b4v = 6.0 ** -0.5, 256.0 ** -0.5, 128.0 ** -0.5, 64.0 ** -0.5
    w1 = jnp.pad(u(k[0], (256, 6), b1v), ((0, 0), (0, 2)))    # (256, 8), cols 6:8 = 0
    return {
        "w1": w1.astype(jnp.bfloat16),
        "b1": u(k[1], (256, 1), b1v),
        "w2": u(k[2], (128, 256), b2v).astype(jnp.bfloat16),
        "b2": u(k[3], (128, 1), b2v),
        "w3": u(k[4], (64, 128), b3v).astype(jnp.bfloat16),
        "b3": u(k[5], (64, 1), b3v),
        "w4": u(k[6], (64, 1), EPS),                          # (in, 1) column, f32
        "b4": u(k[7], (1, 1), b4v),
    }


def rsnet_reference(x, params):
    """Pure-JAX f32 reference using the same (bf16-quantized) stored params."""
    xq = x.astype(jnp.bfloat16).astype(jnp.float32)
    w1 = params["w1"].astype(jnp.float32)[:, :6]
    w2 = params["w2"].astype(jnp.float32)
    w3 = params["w3"].astype(jnp.float32)
    h = jnp.maximum(xq @ w1.T + params["b1"][:, 0], 0.0)
    h = jnp.maximum(h @ w2.T + params["b2"][:, 0], 0.0)
    h = jnp.maximum(h @ w3.T + params["b3"][:, 0], 0.0)
    y = jnp.tanh(h @ params["w4"] + params["b4"][0, 0])
    return y * 0.5 + 0.5


if __name__ == "__main__":
    key = jax.random.PRNGKey(0)
    pkey, xkey = jax.random.split(key)

    params = init_params(pkey)
    B = 1024                                   # 4 grid steps of TB=256
    x = jax.random.normal(xkey, (B, 6), dtype=jnp.float32)

    out = jax.block_until_ready(rsnet_forward(x, params))
    ref = rsnet_reference(x, params)

    assert out.shape == (B, 1)
    # bf16 weights/activations with f32 accumulation -> slightly loosened tolerance.
    err = float(jnp.max(jnp.abs(out - ref)))
    assert jnp.allclose(out, ref, atol=2e-3, rtol=0.0), err

    print("KERNEL_OK")
</pallas_src>

<mosaic_0001>
module attributes {stable_mosaic.version = 11 : i64} {
  func.func @rsnet_kernel(%arg0: i32, %arg1: memref<8x256xbf16, #tpu.memory_space<vmem>>, %arg2: memref<256x8xbf16, #tpu.memory_space<vmem>>, %arg3: memref<256x1xf32, #tpu.memory_space<vmem>>, %arg4: memref<128x256xbf16, #tpu.memory_space<vmem>>, %arg5: memref<128x1xf32, #tpu.memory_space<vmem>>, %arg6: memref<64x128xbf16, #tpu.memory_space<vmem>>, %arg7: memref<64x1xf32, #tpu.memory_space<vmem>>, %arg8: memref<64x1xf32, #tpu.memory_space<vmem>>, %arg9: memref<1x1xf32, #tpu.memory_space<vmem>>, %arg10: memref<1x256xf32, #tpu.memory_space<vmem>>) attributes {dimension_semantics = [#tpu.dimension_semantics<parallel>], iteration_bounds = array<i64: 4>, scalar_prefetch = 0 : i64, scratch_operands = 0 : i64, tpu.core_type = #tpu.core_type<tc>, window_params = [{transform_indices = @transform_0, window_bounds = array<i64: 8, 256>}, {pipeline_mode = #tpu.pipeline_mode<synchronous>, transform_indices = @transform_1, window_bounds = array<i64: 256, 8>}, {pipeline_mode = #tpu.pipeline_mode<synchronous>, transform_indices = @transform_2, window_bounds = array<i64: 256, 1>}, {pipeline_mode = #tpu.pipeline_mode<synchronous>, transform_indices = @transform_3, window_bounds = array<i64: 128, 256>}, {pipeline_mode = #tpu.pipeline_mode<synchronous>, transform_indices = @transform_4, window_bounds = array<i64: 128, 1>}, {pipeline_mode = #tpu.pipeline_mode<synchronous>, transform_indices = @transform_5, window_bounds = array<i64: 64, 128>}, {pipeline_mode = #tpu.pipeline_mode<synchronous>, transform_indices = @transform_6, window_bounds = array<i64: 64, 1>}, {pipeline_mode = #tpu.pipeline_mode<synchronous>, transform_indices = @transform_7, window_bounds = array<i64: 64, 1>}, {pipeline_mode = #tpu.pipeline_mode<synchronous>, transform_indices = @transform_8, window_bounds = array<i64: 1, 1>}, {transform_indices = @transform_9, window_bounds = array<i64: 1, 256>}]} {
    %c0 = arith.constant 0 : index
    %c0_0 = arith.constant 0 : index
    %0 = vector.load %arg1[%c0, %c0_0] : memref<8x256xbf16, #tpu.memory_space<vmem>>, vector<8x256xbf16>
    %c0_1 = arith.constant 0 : index
    %c0_2 = arith.constant 0 : index
    %1 = vector.load %arg2[%c0_1, %c0_2] : memref<256x8xbf16, #tpu.memory_space<vmem>>, vector<256x8xbf16>
    %cst = arith.constant dense<0.000000e+00> : vector<256x256xf32>
    %2 = tpu.matmul %1, %0, %cst {dimension_numbers = #tpu.dot_dimension_numbers<[1], [0], [0], [1], [0, 0, 1, 1], [], []>} : vector<256x8xbf16>, vector<8x256xbf16>, vector<256x256xf32> -> vector<256x256xf32>
    %c0_3 = arith.constant 0 : index
    %c0_4 = arith.constant 0 : index
    %3 = vector.load %arg3[%c0_3, %c0_4] : memref<256x1xf32, #tpu.memory_space<vmem>>, vector<256x1xf32>
    %4 = vector.broadcast %3 : vector<256x1xf32> to vector<256x256xf32>
    %5 = arith.addf %2, %4 : vector<256x256xf32>
    %cst_5 = arith.constant 0.000000e+00 : f32
    %6 = vector.broadcast %cst_5 : f32 to vector<256x256xf32>
    %7 = arith.maximumf %5, %6 : vector<256x256xf32>
    %8 = arith.truncf %7 : vector<256x256xf32> to vector<256x256xbf16>
    %c0_6 = arith.constant 0 : index
    %c0_7 = arith.constant 0 : index
    %9 = vector.load %arg4[%c0_6, %c0_7] : memref<128x256xbf16, #tpu.memory_space<vmem>>, vector<128x256xbf16>
    %cst_8 = arith.constant dense<0.000000e+00> : vector<128x256xf32>
    %10 = tpu.matmul %9, %8, %cst_8 {dimension_numbers = #tpu.dot_dimension_numbers<[1], [0], [0], [1], [0, 0, 1, 1], [], []>} : vector<128x256xbf16>, vector<256x256xbf16>, vector<128x256xf32> -> vector<128x256xf32>
    %c0_9 = arith.constant 0 : index
    %c0_10 = arith.constant 0 : index
    %11 = vector.load %arg5[%c0_9, %c0_10] : memref<128x1xf32, #tpu.memory_space<vmem>>, vector<128x1xf32>
    %12 = vector.broadcast %11 : vector<128x1xf32> to vector<128x256xf32>
    %13 = arith.addf %10, %12 : vector<128x256xf32>
    %cst_11 = arith.constant 0.000000e+00 : f32
    %14 = vector.broadcast %cst_11 : f32 to vector<128x256xf32>
    %15 = arith.maximumf %13, %14 : vector<128x256xf32>
    %16 = arith.truncf %15 : vector<128x256xf32> to vector<128x256xbf16>
    %c0_12 = arith.constant 0 : index
    %c0_13 = arith.constant 0 : index
    %17 = vector.load %arg6[%c0_12, %c0_13] : memref<64x128xbf16, #tpu.memory_space<vmem>>, vector<64x128xbf16>
    %cst_14 = arith.constant dense<0.000000e+00> : vector<64x256xf32>
    %18 = tpu.matmul %17, %16, %cst_14 {dimension_numbers = #tpu.dot_dimension_numbers<[1], [0], [0], [1], [0, 0, 1, 1], [], []>} : vector<64x128xbf16>, vector<128x256xbf16>, vector<64x256xf32> -> vector<64x256xf32>
    %c0_15 = arith.constant 0 : index
    %c0_16 = arith.constant 0 : index
    %19 = vector.load %arg7[%c0_15, %c0_16] : memref<64x1xf32, #tpu.memory_space<vmem>>, vector<64x1xf32>
    %20 = vector.broadcast %19 : vector<64x1xf32> to vector<64x256xf32>
    %21 = arith.addf %18, %20 : vector<64x256xf32>
    %cst_17 = arith.constant 0.000000e+00 : f32
    %22 = vector.broadcast %cst_17 : f32 to vector<64x256xf32>
    %23 = arith.maximumf %21, %22 : vector<64x256xf32>
    %c0_18 = arith.constant 0 : index
    %c0_19 = arith.constant 0 : index
    %24 = vector.load %arg8[%c0_18, %c0_19] : memref<64x1xf32, #tpu.memory_space<vmem>>, vector<64x1xf32>
    %25 = vector.broadcast %24 : vector<64x1xf32> to vector<64x256xf32>
    %26 = arith.mulf %23, %25 : vector<64x256xf32>
    %cst_20 = arith.constant dense<0.000000e+00> : vector<256xf32>
    %27 = vector.multi_reduction <add>, %26, %cst_20 [0] : vector<64x256xf32> to vector<256xf32>
    %28 = vector.shape_cast %27 : vector<256xf32> to vector<1x256xf32>
    %c0_21 = arith.constant 0 : index
    %c0_22 = arith.constant 0 : index
    %29 = vector.load %arg9[%c0_21, %c0_22] : memref<1x1xf32, #tpu.memory_space<vmem>>, vector<1x1xf32>
    %30 = vector.broadcast %29 : vector<1x1xf32> to vector<1x256xf32>
    %31 = arith.addf %28, %30 : vector<1x256xf32>
    %32 = math.tanh %31 : vector<1x256xf32>
    %cst_23 = arith.constant 5.000000e-01 : f32
    %33 = vector.broadcast %cst_23 : f32 to vector<1x256xf32>
    %34 = arith.mulf %32, %33 : vector<1x256xf32>
    %cst_24 = arith.constant 5.000000e-01 : f32
    %35 = vector.broadcast %cst_24 : f32 to vector<1x256xf32>
    %36 = arith.addf %34, %35 : vector<1x256xf32>
    %c0_25 = arith.constant 0 : index
    %c0_26 = arith.constant 0 : index
    %37 = vector.load %arg10[%c0_25, %c0_26] : memref<1x256xf32, #tpu.memory_space<vmem>>, vector<1x256xf32>
    tpu.vector_store %arg10[%c0_25, %c0_26], %36 {strides = array<i32>} : memref<1x256xf32, #tpu.memory_space<vmem>>, vector<1x256xf32>,
    return
  }
  func.func @transform_0(%arg0: i32) -> (i32, i32) {
    %c0_i32 = arith.constant 0 : i32
    %c0_i32_0 = arith.constant 0 : i32
    return %c0_i32, %arg0 : i32, i32
  }
  func.func @transform_1(%arg0: i32) -> (i32, i32) {
    %c0_i32 = arith.constant 0 : i32
    %c0_i32_0 = arith.constant 0 : i32
    %c0_i32_1 = arith.constant 0 : i32
    return %c0_i32, %c0_i32_0 : i32, i32
  }
  func.func @transform_2(%arg0: i32) -> (i32, i32) {
    %c0_i32 = arith.constant 0 : i32
    %c0_i32_0 = arith.constant 0 : i32
    %c0_i32_1 = arith.constant 0 : i32
    return %c0_i32, %c0_i32_0 : i32, i32
  }
  func.func @transform_3(%arg0: i32) -> (i32, i32) {
    %c0_i32 = arith.constant 0 : i32
    %c0_i32_0 = arith.constant 0 : i32
    %c0_i32_1 = arith.constant 0 : i32
    return %c0_i32, %c0_i32_0 : i32, i32
  }
  func.func @transform_4(%arg0: i32) -> (i32, i32) {
    %c0_i32 = arith.constant 0 : i32
    %c0_i32_0 = arith.constant 0 : i32
    %c0_i32_1 = arith.constant 0 : i32
    return %c0_i32, %c0_i32_0 : i32, i32
  }
  func.func @transform_5(%arg0: i32) -> (i32, i32) {
    %c0_i32 = arith.constant 0 : i32
    %c0_i32_0 = arith.constant 0 : i32
    %c0_i32_1 = arith.constant 0 : i32
    return %c0_i32, %c0_i32_0 : i32, i32
  }
  func.func @transform_6(%arg0: i32) -> (i32, i32) {
    %c0_i32 = arith.constant 0 : i32
    %c0_i32_0 = arith.constant 0 : i32
    %c0_i32_1 = arith.constant 0 : i32
    return %c0_i32, %c0_i32_0 : i32, i32
  }
  func.func @transform_7(%arg0: i32) -> (i32, i32) {
    %c0_i32 = arith.constant 0 : i32
    %c0_i32_0 = arith.constant 0 : i32
    %c0_i32_1 = arith.constant 0 : i32
    return %c0_i32, %c0_i32_0 : i32, i32
  }
  func.func @transform_8(%arg0: i32) -> (i32, i32) {
    %c0_i32 = arith.constant 0 : i32
    %c0_i32_0 = arith.constant 0 : i32
    %c0_i32_1 = arith.constant 0 : i32
    return %c0_i32, %c0_i32_0 : i32, i32
  }
  func.func @transform_9(%arg0: i32) -> (i32, i32) {
    %c0_i32 = arith.constant 0 : i32
    %c0_i32_0 = arith.constant 0 : i32
    return %c0_i32, %arg0 : i32, i32
  }
}

</mosaic_0001>

<llo_original>
// kernel: tpu_custom_call.1
$region0: #{tpu_custom_call.1}
  #allocation0 [shape = 'u32[]', space=smem, size = 0x4, offset = 0x4, fixed_abs, tag = 'smem constant byte address 0x4 - core index']
  #allocation1 [shape = 'u32[144,128]{1,0:T(1,128)}', space=vmem, size = 0x12000, scoped, tag = 'internal scratch']
  #allocation2 [shape = 'f32[1,1]{1,0:T(1,128)S(1)}', space=vmem, size = 0x200, scoped, tag = 'scoped memory for tpu_custom_call.1']
  %s0 = inlined_call_operand.vmem [shape: bf16[8,1024], index: 0, kind: input, shape index: {}]
  %s1 = inlined_call_operand.vmem [shape: bf16[256,8], index: 1, kind: input, shape index: {}]
  %s2 = inlined_call_operand.vmem [shape: f32[256,1], index: 2, kind: input, shape index: {}]
  %s3 = inlined_call_operand.vmem [shape: bf16[128,256], index: 3, kind: input, shape index: {}]
  %s4 = inlined_call_operand.vmem [shape: f32[128,1], index: 4, kind: input, shape index: {}]
  %s5 = inlined_call_operand.vmem [shape: bf16[64,128], index: 5, kind: input, shape index: {}]
  %s6 = inlined_call_operand.vmem [shape: f32[64,1], index: 6, kind: input, shape index: {}]
  %s7 = inlined_call_operand.vmem [shape: f32[64,1], index: 7, kind: input, shape index: {}]
  %s8 = inlined_call_operand.<no memory space> [shape: f32[1,1], index: 8, kind: input, shape index: {}]
  %s9 = inlined_call_operand.hbm [shape: f32[1,1024], index: 9, kind: output, shape index: {}]
  %s10 = sld [smem:[#allocation0]]
  $region69: #{tpu_custom_call.1} parent=0
    _
  %s12 = ssub.s32 1, %s10
  %s13 = scalar_select 0, %s12, %s10
  %v14 = vstv %s8
  %15 = vst [vmem:[#allocation2] sm:$0x1] %v14
  $region1: #{tpu_custom_call.1} parent=0
    #allocation3 [shape = 'u8[2048]{0}', space=vmem, size = 0x800, scoped, tag = 'output window, operand 0']
    #allocation4 [shape = 's32[2]{0}', space=sflag, size = 0x8, scoped, tag = 'scoped memory for tpu_custom_call.1']
    %16 = vsyncpa [#allocation4], 0
    %s17 = scalar_lea.sflag [#allocation4], 1
    %18 = vsyncpa %s17, 0
    loop: start=0, step=1, limit=6
    $region2: #{tpu_custom_call.1} parent=1 // loop_pre_header
      _
    $region3: #{tpu_custom_call.1} parent=1 // loop_header
      %s20 = sphi 0, %s24
      %p21 = scmp.ge.s32.totalorder %s20, 6
      %s30 = sphi 0, %s32
      %s33 = sphi 0, %s30
      %s34 = sphi 0, %s33
      %s50 = sphi 0, %s34
      %s54 = sphi 0, %s54
      %s56 = sphi 0, %s54
      %s57 = sphi 0, %s56
      %s71 = sphi 0, %s57
      %s75 = sphi 0, %s75
      %s77 = sphi 0, %s75
      %s78 = sphi 0, %s77
      %s92 = sphi 0, %s78
      %s96 = sphi 0, %s96
      %s98 = sphi 0, %s96
      %s99 = sphi 0, %s98
      %s113 = sphi 0, %s99
      %s117 = sphi 0, %s117
      %s119 = sphi 0, %s117
      %s120 = sphi 0, %s119
      %s134 = sphi 0, %s120
      %s138 = sphi 0, %s138
      %s140 = sphi 0, %s138
      %s141 = sphi 0, %s140
      %s155 = sphi 0, %s141
      %s159 = sphi 0, %s159
      %s161 = sphi 0, %s159
      %s162 = sphi 0, %s161
      %s176 = sphi 0, %s162
      %s180 = sphi 0, %s180
      %s182 = sphi 0, %s180
      %s183 = sphi 0, %s182
      %s197 = sphi 0, %s183
      %s201 = sphi 0, %s201
      %s203 = sphi 0, %s201
      %s204 = sphi 0, %s203
      %s218 = sphi 0, %s204
      %s224 = sphi 0, %s226
      %s227 = sphi 0, %s224
      %s228 = sphi 0, %s227
      %s244 = sphi 0, %s228
    $region4: #{tpu_custom_call.1} parent=1 // loop_header_branch
      %23 = sbr.rel (%p21) target = $region8
    $region5: #{tpu_custom_call.1} parent=1 // loop_body
      %s25 = ssub.s32 %s20, 1
      %s26 = ssub.s32 %s20, 2
      %s27 = sadd.s32 %s20, 1
      %s28 = ssub.s32 %s20, %s27
      %p29 = scmp.eq.s32.totalorder %s28, 0
      %s31 = sadd.s32 %s30, 1
      %s32 = scalar_select %p29, %s30, %s31
      %p35 = pneg %p29
      %p36 = scmp.eq.s32.totalorder %s20, 3
      %p37 = por %p35, %p36
      %p38 = scmp.ne.s32.totalorder %s30, %s33
      %p39 = scmp.eq.s32.totalorder %s20, 0
      %p40 = por %p38, %p39
      %p41 = scmp.ne.s32.totalorder %s30, %s33
      %p42 = scmp.eq.s32.totalorder %s25, 3
      %p43 = por %p41, %p42
      %p44 = scmp.ne.s32.totalorder %s33, %s34
      %p45 = scmp.eq.s32.totalorder %s25, 0
      %p46 = por %p44, %p45
      %p47 = scmp.ne.s32.totalorder %s33, %s34
      %p48 = scmp.eq.s32.totalorder %s26, 3
      %p49 = por %p47, %p48
      %p51 = scmp.ne.s32.totalorder %s34, %s50
      %p52 = scmp.eq.s32.totalorder %s26, 0
      %p53 = por %p51, %p52
      %s55 = sadd.s32 %s54, 1
      %p58 = scmp.eq.s32.totalorder %s20, 3
      %p59 = scmp.ne.s32.totalorder %s54, %s56
      %p60 = scmp.eq.s32.totalorder %s20, 0
      %p61 = por %p59, %p60
      %p62 = scmp.ne.s32.totalorder %s54, %s56
      %p63 = scmp.eq.s32.totalorder %s25, 3
      %p64 = por %p62, %p63
      %p65 = scmp.ne.s32.totalorder %s56, %s57
      %p66 = scmp.eq.s32.totalorder %s25, 0
      %p67 = por %p65, %p66
      %p68 = scmp.ne.s32.totalorder %s56, %s57
      %p69 = scmp.eq.s32.totalorder %s26, 3
      %p70 = por %p68, %p69
      %p72 = scmp.ne.s32.totalorder %s57, %s71
      %p73 = scmp.eq.s32.totalorder %s26, 0
      %p74 = por %p72, %p73
      %s76 = sadd.s32 %s75, 1
      %p79 = scmp.eq.s32.totalorder %s20, 3
      %p80 = scmp.ne.s32.totalorder %s75, %s77
      %p81 = scmp.eq.s32.totalorder %s20, 0
      %p82 = por %p80, %p81
      %p83 = scmp.ne.s32.totalorder %s75, %s77
      %p84 = scmp.eq.s32.totalorder %s25, 3
      %p85 = por %p83, %p84
      %p86 = scmp.ne.s32.totalorder %s77, %s78
      %p87 = scmp.eq.s32.totalorder %s25, 0
      %p88 = por %p86, %p87
      %p89 = scmp.ne.s32.totalorder %s77, %s78
      %p90 = scmp.eq.s32.totalorder %s26, 3
      %p91 = por %p89, %p90
      %p93 = scmp.ne.s32.totalorder %s78, %s92
      %p94 = scmp.eq.s32.totalorder %s26, 0
      %p95 = por %p93, %p94
      %s97 = sadd.s32 %s96, 1
      %p100 = scmp.eq.s32.totalorder %s20, 3
      %p101 = scmp.ne.s32.totalorder %s96, %s98
      %p102 = scmp.eq.s32.totalorder %s20, 0
      %p103 = por %p101, %p102
      %p104 = scmp.ne.s32.totalorder %s96, %s98
      %p105 = scmp.eq.s32.totalorder %s25, 3
      %p106 = por %p104, %p105
      %p107 = scmp.ne.s32.totalorder %s98, %s99
      %p108 = scmp.eq.s32.totalorder %s25, 0
      %p109 = por %p107, %p108
      %p110 = scmp.ne.s32.totalorder %s98, %s99
      %p111 = scmp.eq.s32.totalorder %s26, 3
      %p112 = por %p110, %p111
      %p114 = scmp.ne.s32.totalorder %s99, %s113
      %p115 = scmp.eq.s32.totalorder %s26, 0
      %p116 = por %p114, %p115
      %s118 = sadd.s32 %s117, 1
      %p121 = scmp.eq.s32.totalorder %s20, 3
      %p122 = scmp.ne.s32.totalorder %s117, %s119
      %p123 = scmp.eq.s32.totalorder %s20, 0
      %p124 = por %p122, %p123
      %p125 = scmp.ne.s32.totalorder %s117, %s119
      %p126 = scmp.eq.s32.totalorder %s25, 3
      %p127 = por %p125, %p126
      %p128 = scmp.ne.s32.totalorder %s119, %s120
      %p129 = scmp.eq.s32.totalorder %s25, 0
      %p130 = por %p128, %p129
      %p131 = scmp.ne.s32.totalorder %s119, %s120
      %p132 = scmp.eq.s32.totalorder %s26, 3
      %p133 = por %p131, %p132
      %p135 = scmp.ne.s32.totalorder %s120, %s134
      %p136 = scmp.eq.s32.totalorder %s26, 0
      %p137 = por %p135, %p136
      %s139 = sadd.s32 %s138, 1
      %p142 = scmp.eq.s32.totalorder %s20, 3
      %p143 = scmp.ne.s32.totalorder %s138, %s140
      %p144 = scmp.eq.s32.totalorder %s20, 0
      %p145 = por %p143, %p144
      %p146 = scmp.ne.s32.totalorder %s138, %s140
      %p147 = scmp.eq.s32.totalorder %s25, 3
      %p148 = por %p146, %p147
      %p149 = scmp.ne.s32.totalorder %s140, %s141
      %p150 = scmp.eq.s32.totalorder %s25, 0
      %p151 = por %p149, %p150
      %p152 = scmp.ne.s32.totalorder %s140, %s141
      %p153 = scmp.eq.s32.totalorder %s26, 3
      %p154 = por %p152, %p153
      %p156 = scmp.ne.s32.totalorder %s141, %s155
      %p157 = scmp.eq.s32.totalorder %s26, 0
      %p158 = por %p156, %p157
      %s160 = sadd.s32 %s159, 1
      %p163 = scmp.eq.s32.totalorder %s20, 3
      %p164 = scmp.ne.s32.totalorder %s159, %s161
      %p165 = scmp.eq.s32.totalorder %s20, 0
      %p166 = por %p164, %p165
      %p167 = scmp.ne.s32.totalorder %s159, %s161
      %p168 = scmp.eq.s32.totalorder %s25, 3
      %p169 = por %p167, %p168
      %p170 = scmp.ne.s32.totalorder %s161, %s162
      %p171 = scmp.eq.s32.totalorder %s25, 0
      %p172 = por %p170, %p171
      %p173 = scmp.ne.s32.totalorder %s161, %s162
      %p174 = scmp.eq.s32.totalorder %s26, 3
      %p175 = por %p173, %p174
      %p177 = scmp.ne.s32.totalorder %s162, %s176
      %p178 = scmp.eq.s32.totalorder %s26, 0
      %p179 = por %p177, %p178
      %s181 = sadd.s32 %s180, 1
      %p184 = scmp.eq.s32.totalorder %s20, 3
      %p185 = scmp.ne.s32.totalorder %s180, %s182
      %p186 = scmp.eq.s32.totalorder %s20, 0
      %p187 = por %p185, %p186
      %p188 = scmp.ne.s32.totalorder %s180, %s182
      %p189 = scmp.eq.s32.totalorder %s25, 3
      %p190 = por %p188, %p189
      %p191 = scmp.ne.s32.totalorder %s182, %s183
      %p192 = scmp.eq.s32.totalorder %s25, 0
      %p193 = por %p191, %p192
      %p194 = scmp.ne.s32.totalorder %s182, %s183
      %p195 = scmp.eq.s32.totalorder %s26, 3
      %p196 = por %p194, %p195
      %p198 = scmp.ne.s32.totalorder %s183, %s197
      %p199 = scmp.eq.s32.totalorder %s26, 0
      %p200 = por %p198, %p199
      %s202 = sadd.s32 %s201, 1
      %p205 = scmp.eq.s32.totalorder %s20, 3
      %p206 = scmp.ne.s32.totalorder %s201, %s203
      %p207 = scmp.eq.s32.totalorder %s20, 0
      %p208 = por %p206, %p207
      %p209 = scmp.ne.s32.totalorder %s201, %s203
      %p210 = scmp.eq.s32.totalorder %s25, 3
      %p211 = por %p209, %p210
      %p212 = scmp.ne.s32.totalorder %s203, %s204
      %p213 = scmp.eq.s32.totalorder %s25, 0
      %p214 = por %p212, %p213
      %p215 = scmp.ne.s32.totalorder %s203, %s204
      %p216 = scmp.eq.s32.totalorder %s26, 3
      %p217 = por %p215, %p216
      %p219 = scmp.ne.s32.totalorder %s204, %s218
      %p220 = scmp.eq.s32.totalorder %s26, 0
      %p221 = por %p219, %p220
      %s222 = ssub.s32 %s20, %s27
      %p223 = scmp.eq.s32.totalorder %s222, 0
      %s225 = sadd.s32 %s224, 1
      %s226 = scalar_select %p223, %s224, %s225
      %p229 = pneg %p223
      %p230 = scmp.eq.s32.totalorder %s20, 3
      %p231 = por %p229, %p230
      %p232 = scmp.ne.s32.totalorder %s224, %s227
      %p233 = scmp.eq.s32.totalorder %s20, 0
      %p234 = por %p232, %p233
      %p235 = scmp.ne.s32.totalorder %s224, %s227
      %p236 = scmp.eq.s32.totalorder %s25, 3
      %p237 = por %p235, %p236
      %p238 = scmp.ne.s32.totalorder %s227, %s228
      %p239 = scmp.eq.s32.totalorder %s25, 0
      %p240 = por %p238, %p239
      %p241 = scmp.ne.s32.totalorder %s227, %s228
      %p242 = scmp.eq.s32.totalorder %s26, 3
      %p243 = por %p241, %p242
      %p245 = scmp.ne.s32.totalorder %s228, %s244
      %p246 = scmp.eq.s32.totalorder %s26, 0
      %p247 = por %p245, %p246
      %p248 = scmp.le.s32.totalorder 1, %s20
      %p249 = scmp.lt.s32.totalorder %s20, 5
      %p250 = pnand %p248, %p249
      %p251 = pneg %p250
      // Predicated region
      $region9: #{tpu_custom_call.1} parent=5 // pred_check
        _
      $region10: #{tpu_custom_call.1} parent=5 // pred_check_branch
        %253 = sbr.rel (%p250) target = $region12
      $region11: #{tpu_custom_call.1} parent=5 // pred_region
        %s254 = ssub.s32 %s20, 1
        // Predicated region
        $region13: #{tpu_custom_call.1} parent=11 // pred_check
          %p255 = pneg %p67
        $region14: #{tpu_custom_call.1} parent=11 // pred_check_branch
          %257 = sbr.rel (%p255) target = $region16
        $region15: #{tpu_custom_call.1} parent=11 // pred_region
          _
        $region16: #{tpu_custom_call.1} parent=11 // pred_fallthru
          _
        // Predicated region
        $region17: #{tpu_custom_call.1} parent=11 // pred_check
          %p258 = pneg %p88
        $region18: #{tpu_custom_call.1} parent=11 // pred_check_branch
          %260 = sbr.rel (%p258) target = $region20
        $region19: #{tpu_custom_call.1} parent=11 // pred_region
          _
        $region20: #{tpu_custom_call.1} parent=11 // pred_fallthru
          _
        // Predicated region
        $region21: #{tpu_custom_call.1} parent=11 // pred_check
          %p261 = pneg %p109
        $region22: #{tpu_custom_call.1} parent=11 // pred_check_branch
          %263 = sbr.rel (%p261) target = $region24
        $region23: #{tpu_custom_call.1} parent=11 // pred_region
          _
        $region24: #{tpu_custom_call.1} parent=11 // pred_fallthru
          _
        // Predicated region
        $region25: #{tpu_custom_call.1} parent=11 // pred_check
          %p264 = pneg %p130
        $region26: #{tpu_custom_call.1} parent=11 // pred_check_branch
          %266 = sbr.rel (%p264) target = $region28
        $region27: #{tpu_custom_call.1} parent=11 // pred_region
          _
        $region28: #{tpu_custom_call.1} parent=11 // pred_fallthru
          _
        // Predicated region
        $region29: #{tpu_custom_call.1} parent=11 // pred_check
          %p267 = pneg %p151
        $region30: #{tpu_custom_call.1} parent=11 // pred_check_branch
          %269 = sbr.rel (%p267) target = $region32
        $region31: #{tpu_custom_call.1} parent=11 // pred_region
          _
        $region32: #{tpu_custom_call.1} parent=11 // pred_fallthru
          _
        // Predicated region
        $region33: #{tpu_custom_call.1} parent=11 // pred_check
          %p270 = pneg %p172
        $region34: #{tpu_custom_call.1} parent=11 // pred_check_branch
          %272 = sbr.rel (%p270) target = $region36
        $region35: #{tpu_custom_call.1} parent=11 // pred_region
          _
        $region36: #{tpu_custom_call.1} parent=11 // pred_fallthru
          _
        // Predicated region
        $region37: #{tpu_custom_call.1} parent=11 // pred_check
          %p273 = pneg %p193
        $region38: #{tpu_custom_call.1} parent=11 // pred_check_branch
          %275 = sbr.rel (%p273) target = $region40
        $region39: #{tpu_custom_call.1} parent=11 // pred_region
          _
        $region40: #{tpu_custom_call.1} parent=11 // pred_fallthru
          _
        // Predicated region
        $region41: #{tpu_custom_call.1} parent=11 // pred_check
          %p276 = pneg %p214
        $region42: #{tpu_custom_call.1} parent=11 // pred_check_branch
          %278 = sbr.rel (%p276) target = $region44
        $region43: #{tpu_custom_call.1} parent=11 // pred_region
          _
        $region44: #{tpu_custom_call.1} parent=11 // pred_fallthru
          _
      $region12: #{tpu_custom_call.1} parent=5 // pred_fallthru
        _
      %p279 = scmp.lt.s32.totalorder %s20, 4
      // Predicated region
      $region45: #{tpu_custom_call.1} parent=5 // pred_check
        %p280 = pneg %p279
      $region46: #{tpu_custom_call.1} parent=5 // pred_check_branch
        %282 = sbr.rel (%p280) target = $region48
      $region47: #{tpu_custom_call.1} parent=5 // pred_region
        // Predicated region
        $region49: #{tpu_custom_call.1} parent=47 // pred_check
          %p283 = pneg %p40
        $region50: #{tpu_custom_call.1} parent=47 // pred_check_branch
          %285 = sbr.rel (%p283) target = $region52
        $region51: #{tpu_custom_call.1} parent=47 // pred_region
          %s286 = smul.u32 2, %s20
          %p287 = scmp.lt.s32.totalorder %s286, 7
          %s288 = scalar_select %p287, %s286, 7
          %s289 = smul.addr %s288, 4
          %s290 = scalar_lea.vmem %s0, %s289
          %s291 = smul.u32 2, %s20
        $region52: #{tpu_custom_call.1} parent=47 // pred_fallthru
          _
      $region48: #{tpu_custom_call.1} parent=5 // pred_fallthru
        _
      %p292 = scmp.le.s32.totalorder 1, %s20
      %p293 = scmp.lt.s32.totalorder %s20, 5
      %p294 = pnand %p292, %p293
      %p295 = pneg %p294
      // Predicated region
      $region53: #{tpu_custom_call.1} parent=5 // pred_check
        _
      $region54: #{tpu_custom_call.1} parent=5 // pred_check_branch
        %297 = sbr.rel (%p294) target = $region56
      $region55: #{tpu_custom_call.1} parent=5 // pred_region
        %s298 = ssub.s32 %s20, 1
        %s299 = smul.u32 2, %s25
        %p300 = scmp.lt.s32.totalorder %s299, 7
        %s301 = scalar_select %p300, %s299, 7
        %s302 = smul.addr %s301, 4
        %s303 = scalar_lea.vmem %s0, %s302
        %p304 = pneg %p46
        %p305 = pneg %p43
        %p306 = pneg %p67
        %p307 = pneg %p64
        %p308 = pneg %p88
        %p309 = pneg %p85
        %p310 = pneg %p109
        %p311 = pneg %p106
        %p312 = pneg %p130
        %p313 = pneg %p127
        %p314 = pneg %p151
        %p315 = pneg %p148
        %p316 = pneg %p172
        %p317 = pneg %p169
        %p318 = pneg %p193
        %p319 = pneg %p190
        %p320 = pneg %p214
        %p321 = pneg %p211
        %p322 = pneg %p240
        %p323 = pneg %p237
        %s324 = sand.u32 %s227, 1
        %s325 = scalar_lea.sflag [#allocation4], %s324
        %s326 = sand.u32 %s227, 1
        %s327 = smul.addr %s326, 2
        %s328 = scalar_lea.vmem [#allocation3], %s327
        %s329 = smul.u32 2, %s25
        %p330 = scmp.lt.s32.totalorder %s329, 7
        %s331 = scalar_select %p330, %s329, 7
        %s332 = smul.addr %s331, 4
        %s333 = scalar_lea.vmem %s0, %s332
        %s334 = smul.u32 2, %s25
        %s335 = smul.u32 2, %s25
        %v337 = vld [vmem:[%s333] sm:$0xff]
        %v338 = vld [vmem:[%s1] sm:$0xf]
        %v339 = vld [vmem:[%s1 + $0x4] sm:$0xf]
        %v340 = vld [vmem:[%s1 + $0x8] sm:$0xf]
        %v341 = vld [vmem:[%s1 + $0xc] sm:$0xf]
        %v342 = vld [vmem:[%s1 + $0x10] sm:$0xf]
        %v343 = vld [vmem:[%s1 + $0x14] sm:$0xf]
        %v344 = vld [vmem:[%s1 + $0x18] sm:$0xf]
        %v345 = vld [vmem:[%s1 + $0x1c] sm:$0xf]
        %v346 = vld [vmem:[%s1 + $0x20] sm:$0xf]
        %v347 = vld [vmem:[%s1 + $0x24] sm:$0xf]
        %v348 = vld [vmem:[%s1 + $0x28] sm:$0xf]
        %v349 = vld [vmem:[%s1 + $0x2c] sm:$0xf]
        %v350 = vld [vmem:[%s1 + $0x30] sm:$0xf]
        %v351 = vld [vmem:[%s1 + $0x34] sm:$0xf]
        %v352 = vld [vmem:[%s1 + $0x38] sm:$0xf]
        %v353 = vld [vmem:[%s1 + $0x3c] sm:$0xf]
        %v354 = vld [vmem:[%s1 + $0x40] sm:$0xf]
        %v355 = vld [vmem:[%s1 + $0x44] sm:$0xf]
        %v356 = vld [vmem:[%s1 + $0x48] sm:$0xf]
        %v357 = vld [vmem:[%s1 + $0x4c] sm:$0xf]
        %v358 = vld [vmem:[%s1 + $0x50] sm:$0xf]
        %v359 = vld [vmem:[%s1 + $0x54] sm:$0xf]
        %v360 = vld [vmem:[%s1 + $0x58] sm:$0xf]
        %v361 = vld [vmem:[%s1 + $0x5c] sm:$0xf]
        %v362 = vld [vmem:[%s1 + $0x60] sm:$0xf]
        %v363 = vld [vmem:[%s1 + $0x64] sm:$0xf]
        %v364 = vld [vmem:[%s1 + $0x68] sm:$0xf]
        %v365 = vld [vmem:[%s1 + $0x6c] sm:$0xf]
        %v366 = vld [vmem:[%s1 + $0x70] sm:$0xf]
        %v367 = vld [vmem:[%s1 + $0x74] sm:$0xf]
        %v368 = vld [vmem:[%s1 + $0x78] sm:$0xf]
        %v369 = vld [vmem:[%s1 + $0x7c] sm:$0xf]
        %v370 = vld [vmem:[%s2] sm:$0xff]
        %v371 = vld [vmem:[%s2 + $0x8] sm:$0xff]
        %v372 = vld [vmem:[%s2 + $0x10] sm:$0xff]
        %v373 = vld [vmem:[%s2 + $0x18] sm:$0xff]
        %v374 = vld [vmem:[%s2 + $0x20] sm:$0xff]
        %v375 = vld [vmem:[%s2 + $0x28] sm:$0xff]
        %v376 = vld [vmem:[%s2 + $0x30] sm:$0xff]
        %v377 = vld [vmem:[%s2 + $0x38] sm:$0xff]
        %v378 = vld [vmem:[%s2 + $0x40] sm:$0xff]
        %v379 = vld [vmem:[%s2 + $0x48] sm:$0xff]
        %v380 = vld [vmem:[%s2 + $0x50] sm:$0xff]
        %v381 = vld [vmem:[%s2 + $0x58] sm:$0xff]
        %v382 = vld [vmem:[%s2 + $0x60] sm:$0xff]
        %v383 = vld [vmem:[%s2 + $0x68] sm:$0xff]
        %v384 = vld [vmem:[%s2 + $0x70] sm:$0xff]
        %v385 = vld [vmem:[%s2 + $0x78] sm:$0xff]
        %v386 = vld [vmem:[%s2 + $0x80] sm:$0xff]
        %v387 = vld [vmem:[%s2 + $0x88] sm:$0xff]
        %v388 = vld [vmem:[%s2 + $0x90] sm:$0xff]
        %v389 = vld [vmem:[%s2 + $0x98] sm:$0xff]
        %v390 = vld [vmem:[%s2 + $0xa0] sm:$0xff]
        %v391 = vld [vmem:[%s2 + $0xa8] sm:$0xff]
        %v392 = vld [vmem:[%s2 + $0xb0] sm:$0xff]
        %v393 = vld [vmem:[%s2 + $0xb8] sm:$0xff]
        %v394 = vld [vmem:[%s2 + $0xc0] sm:$0xff]
        %v395 = vld [vmem:[%s2 + $0xc8] sm:$0xff]
        %v396 = vld [vmem:[%s2 + $0xd0] sm:$0xff]
        %v397 = vld [vmem:[%s2 + $0xd8] sm:$0xff]
        %v398 = vld [vmem:[%s2 + $0xe0] sm:$0xff]
        %v399 = vld [vmem:[%s2 + $0xe8] sm:$0xff]
        %v400 = vld [vmem:[%s2 + $0xf0] sm:$0xff]
        %v401 = vld [vmem:[%s2 + $0xf8] sm:$0xff]
        %403 = vset.pattern.permute.xlu0 0
        %404 = vperm.xlu0 %403, %v370
        %v405 = vpop.permute.xlu0 %404
        %408 = vset.pattern.permute.xlu0 0
        %409 = vperm.xlu0 %408, %v371
        %v410 = vpop.permute.xlu0 %409
        %413 = vset.pattern.permute.xlu0 0
        %414 = vperm.xlu0 %413, %v372
        %v415 = vpop.permute.xlu0 %414
        %418 = vset.pattern.permute.xlu0 0
        %419 = vperm.xlu0 %418, %v373
        %v420 = vpop.permute.xlu0 %419
        %423 = vset.pattern.permute.xlu0 0
        %424 = vperm.xlu0 %423, %v374
        %v425 = vpop.permute.xlu0 %424
        %428 = vset.pattern.permute.xlu0 0
        %429 = vperm.xlu0 %428, %v375
        %v430 = vpop.permute.xlu0 %429
        %433 = vset.pattern.permute.xlu0 0
        %434 = vperm.xlu0 %433, %v376
        %v435 = vpop.permute.xlu0 %434
        %438 = vset.pattern.permute.xlu0 0
        %439 = vperm.xlu0 %438, %v377
        %v440 = vpop.permute.xlu0 %439
        %443 = vset.pattern.permute.xlu0 0
        %444 = vperm.xlu0 %443, %v378
        %v445 = vpop.permute.xlu0 %444
        %448 = vset.pattern.permute.xlu0 0
        %449 = vperm.xlu0 %448, %v379
        %v450 = vpop.permute.xlu0 %449
        %453 = vset.pattern.permute.xlu0 0
        %454 = vperm.xlu0 %453, %v380
        %v455 = vpop.permute.xlu0 %454
        %458 = vset.pattern.permute.xlu0 0
        %459 = vperm.xlu0 %458, %v381
        %v460 = vpop.permute.xlu0 %459
        %463 = vset.pattern.permute.xlu0 0
        %464 = vperm.xlu0 %463, %v382
        %v465 = vpop.permute.xlu0 %464
        %468 = vset.pattern.permute.xlu0 0
        %469 = vperm.xlu0 %468, %v383
        %v470 = vpop.permute.xlu0 %469
        %473 = vset.pattern.permute.xlu0 0
        %474 = vperm.xlu0 %473, %v384
        %v475 = vpop.permute.xlu0 %474
        %478 = vset.pattern.permute.xlu0 0
        %479 = vperm.xlu0 %478, %v385
        %v480 = vpop.permute.xlu0 %479
        %483 = vset.pattern.permute.xlu0 0
        %484 = vperm.xlu0 %483, %v386
        %v485 = vpop.permute.xlu0 %484
        %488 = vset.pattern.permute.xlu0 0
        %489 = vperm.xlu0 %488, %v387
        %v490 = vpop.permute.xlu0 %489
        %493 = vset.pattern.permute.xlu0 0
        %494 = vperm.xlu0 %493, %v388
        %v495 = vpop.permute.xlu0 %494
        %498 = vset.pattern.permute.xlu0 0
        %499 = vperm.xlu0 %498, %v389
        %v500 = vpop.permute.xlu0 %499
        %503 = vset.pattern.permute.xlu0 0
        %504 = vperm.xlu0 %503, %v390
        %v505 = vpop.permute.xlu0 %504
        %508 = vset.pattern.permute.xlu0 0
        %509 = vperm.xlu0 %508, %v391
        %v510 = vpop.permute.xlu0 %509
        %513 = vset.pattern.permute.xlu0 0
        %514 = vperm.xlu0 %513, %v392
        %v515 = vpop.permute.xlu0 %514
        %518 = vset.pattern.permute.xlu0 0
        %519 = vperm.xlu0 %518, %v393
        %v520 = vpop.permute.xlu0 %519
        %523 = vset.pattern.permute.xlu0 0
        %524 = vperm.xlu0 %523, %v394
        %v525 = vpop.permute.xlu0 %524
        %528 = vset.pattern.permute.xlu0 0
        %529 = vperm.xlu0 %528, %v395
        %v530 = vpop.permute.xlu0 %529
        %533 = vset.pattern.permute.xlu0 0
        %534 = vperm.xlu0 %533, %v396
        %v535 = vpop.permute.xlu0 %534
        %538 = vset.pattern.permute.xlu0 0
        %539 = vperm.xlu0 %538, %v397
        %v540 = vpop.permute.xlu0 %539
        %543 = vset.pattern.permute.xlu0 0
        %544 = vperm.xlu0 %543, %v398
        %v545 = vpop.permute.xlu0 %544
        %548 = vset.pattern.permute.xlu0 0
        %549 = vperm.xlu0 %548, %v399
        %v550 = vpop.permute.xlu0 %549
        %553 = vset.pattern.permute.xlu0 0
        %554 = vperm.xlu0 %553, %v400
        %v555 = vpop.permute.xlu0 %554
        %558 = vset.pattern.permute.xlu0 0
        %559 = vperm.xlu0 %558, %v401
        %v560 = vpop.permute.xlu0 %559
        %v594 = vunpack.c.l.b16 %v338
        %v595 = vunpack.c.l.b16 %v339
        %v596 = vunpack.c.l.b16 %v340
        %v597 = vunpack.c.l.b16 %v341
        %v598 = vunpack.c.l.b16 %v342
        %v599 = vunpack.c.l.b16 %v343
        %v600 = vunpack.c.l.b16 %v344
        %v601 = vunpack.c.l.b16 %v345
        %v602 = vunpack.c.l.b16 %v346
        %v603 = vunpack.c.l.b16 %v347
        %v604 = vunpack.c.l.b16 %v348
        %v605 = vunpack.c.l.b16 %v349
        %v606 = vunpack.c.l.b16 %v350
        %v607 = vunpack.c.l.b16 %v351
        %v608 = vunpack.c.l.b16 %v352
        %v609 = vunpack.c.l.b16 %v353
        %v610 = vunpack.c.l.b16 %v354
        %v611 = vunpack.c.l.b16 %v355
        %v612 = vunpack.c.l.b16 %v356
        %v613 = vunpack.c.l.b16 %v357
        %v614 = vunpack.c.l.b16 %v358
        %v615 = vunpack.c.l.b16 %v359
        %v616 = vunpack.c.l.b16 %v360
        %v617 = vunpack.c.l.b16 %v361
        %v618 = vunpack.c.l.b16 %v362
        %v619 = vunpack.c.l.b16 %v363
        %v620 = vunpack.c.l.b16 %v364
        %v621 = vunpack.c.l.b16 %v365
        %v622 = vunpack.c.l.b16 %v366
        %v623 = vunpack.c.l.b16 %v367
        %v624 = vunpack.c.l.b16 %v368
        %v625 = vunpack.c.l.b16 %v369
        %v626 = vpack.c.b16 %v595, %v594
        %v627 = vpack.c.b16 %v597, %v596
        %v628 = vpack.c.b16 %v599, %v598
        %v629 = vpack.c.b16 %v601, %v600
        %v630 = vpack.c.b16 %v603, %v602
        %v631 = vpack.c.b16 %v605, %v604
        %v632 = vpack.c.b16 %v607, %v606
        %v633 = vpack.c.b16 %v609, %v608
        %v634 = vpack.c.b16 %v611, %v610
        %v635 = vpack.c.b16 %v613, %v612
        %v636 = vpack.c.b16 %v615, %v614
        %v637 = vpack.c.b16 %v617, %v616
        %v638 = vpack.c.b16 %v619, %v618
        %v639 = vpack.c.b16 %v621, %v620
        %v640 = vpack.c.b16 %v623, %v622
        %v641 = vpack.c.b16 %v625, %v624
        %v643 = vunpack.c.l.b16 %v337
        %v644 = vunpack.c.h.b16 %v337
        %v645 = vpack.c.b16 %v643, %v643
        %v646 = vpack.c.b16 %v644, %v644
        %vm647 = vcmask 64512
        %v649 = vsel %vm647, %v626, 0
        %v652 = vsel %vm647, %v627, 0
        %v655 = vsel %vm647, %v628, 0
        %v658 = vsel %vm647, %v629, 0
        %v661 = vsel %vm647, %v630, 0
        %v664 = vsel %vm647, %v631, 0
        %v667 = vsel %vm647, %v632, 0
        %v670 = vsel %vm647, %v633, 0
        %v673 = vsel %vm647, %v634, 0
        %v676 = vsel %vm647, %v635, 0
        %v679 = vsel %vm647, %v636, 0
        %v682 = vsel %vm647, %v637, 0
        %v685 = vsel %vm647, %v638, 0
        %v688 = vsel %vm647, %v639, 0
        %v691 = vsel %vm647, %v640, 0
        %v694 = vsel %vm647, %v641, 0
        %vm696 = vcmask 1043456
        %v698 = vsel %vm696, %v645, 0
        %v701 = vsel %vm696, %v646, 0
        %703 = vmatprep.subr.bf16.mxu0 0
        %704 = vmatpush1.bf16.msra.mxu0 0
        %705 = vmatprep.subr.bf16.mxu0 0
        %706 = vmatpush1.bf16.msra.mxu0 0
        %707 = vmatprep.subr.bf16.mxu0 0
        %708 = vmatpush1.bf16.msra.mxu0 0
        %709 = vmatprep.subr.bf16.mxu0 0
        %710 = vmatpush1.bf16.msra.mxu0 0
        %711 = vmatprep.subr.bf16.mxu0 0
        %712 = vmatpush1.bf16.msra.mxu0 0
        %713 = vmatprep.subr.bf16.mxu0 0
        %714 = vmatpush1.bf16.msra.mxu0 0
        %715 = vmatprep.subr.bf16.mxu0 0
        %716 = vmatpush1.bf16.msra.mxu0 0
        %717 = vmatprep.subr.bf16.mxu0 %v701
        %718 = vmatpush1.bf16.msra.mxu0 %v698
        %719 = vmatprep.subr.bf16.mxu0 0
        %720 = vmatpush2.bf16.msra.mxu0 0
        %721 = vmatprep.subr.bf16.mxu0 0
        %722 = vmatpush2.bf16.msra.mxu0 0
        %723 = vmatprep.subr.bf16.mxu0 0
        %724 = vmatpush2.bf16.msra.mxu0 0
        %725 = vmatprep.subr.bf16.mxu0 0
        %726 = vmatpush2.bf16.msra.mxu0 0
        %727 = vmatprep.subr.bf16.mxu0 0
        %728 = vmatpush2.bf16.msra.mxu0 0
        %729 = vmatprep.subr.bf16.mxu0 0
        %730 = vmatpush2.bf16.msra.mxu0 0
        %731 = vmatprep.subr.bf16.mxu0 0
        %732 = vmatpush2.bf16.msra.mxu0 0
        %733 = vmatprep.subr.bf16.mxu0 0
        %734 = vmatpush2.bf16.msra.mxu0 0
        %735 = vmatprep.mubr.bf16.mxu0 0
        %736 = vmatmul.mubr.bf16.gmra.mxu0 %v649
        %v737 = vpop.f32.mrf.mxu0
        %v738 = vadd.f32 %v405, %v737
        %v739 = vpop.f32.mrf.mxu0
        %v740 = vadd.f32 %v405, %v739
        %v741 = vpop.f32.mrf.mxu0
        %v742 = vadd.f32 %v410, %v741
        %v743 = vpop.f32.mrf.mxu0
        %v744 = vadd.f32 %v410, %v743
        %745 = vmatprep.mubr.bf16.mxu0 0
        %746 = vmatmul.mubr.bf16.gmra.mxu0 %v652
        %v747 = vpop.f32.mrf.mxu0
        %v748 = vadd.f32 %v415, %v747
        %v749 = vpop.f32.mrf.mxu0
        %v750 = vadd.f32 %v415, %v749
        %v751 = vpop.f32.mrf.mxu0
        %v752 = vadd.f32 %v420, %v751
        %v753 = vpop.f32.mrf.mxu0
        %v754 = vadd.f32 %v420, %v753
        %755 = vmatprep.mubr.bf16.mxu0 0
        %756 = vmatmul.mubr.bf16.gmra.mxu0 %v655
        %v757 = vpop.f32.mrf.mxu0
        %v758 = vadd.f32 %v425, %v757
        %v759 = vpop.f32.mrf.mxu0
        %v760 = vadd.f32 %v425, %v759
        %v761 = vpop.f32.mrf.mxu0
        %v762 = vadd.f32 %v430, %v761
        %v763 = vpop.f32.mrf.mxu0
        %v764 = vadd.f32 %v430, %v763
        %765 = vmatprep.mubr.bf16.mxu0 0
        %766 = vmatmul.mubr.bf16.gmra.mxu0 %v658
        %v767 = vpop.f32.mrf.mxu0
        %v768 = vadd.f32 %v435, %v767
        %v769 = vpop.f32.mrf.mxu0
        %v770 = vadd.f32 %v435, %v769
        %v771 = vpop.f32.mrf.mxu0
        %v772 = vadd.f32 %v440, %v771
        %v773 = vpop.f32.mrf.mxu0
        %v774 = vadd.f32 %v440, %v773
        %775 = vmatprep.mubr.bf16.mxu0 0
        %776 = vmatmul.mubr.bf16.gmra.mxu0 %v661
        %v777 = vpop.f32.mrf.mxu0
        %v778 = vadd.f32 %v445, %v777
        %v779 = vpop.f32.mrf.mxu0
        %v780 = vadd.f32 %v445, %v779
        %v781 = vpop.f32.mrf.mxu0
        %v782 = vadd.f32 %v450, %v781
        %v783 = vpop.f32.mrf.mxu0
        %v784 = vadd.f32 %v450, %v783
        %785 = vmatprep.mubr.bf16.mxu0 0
        %786 = vmatmul.mubr.bf16.gmra.mxu0 %v664
        %v787 = vpop.f32.mrf.mxu0
        %v788 = vadd.f32 %v455, %v787
        %v789 = vpop.f32.mrf.mxu0
        %v790 = vadd.f32 %v455, %v789
        %v791 = vpop.f32.mrf.mxu0
        %v792 = vadd.f32 %v460, %v791
        %v793 = vpop.f32.mrf.mxu0
        %v794 = vadd.f32 %v460, %v793
        %795 = vmatprep.mubr.bf16.mxu0 0
        %796 = vmatmul.mubr.bf16.gmra.mxu0 %v667
        %v797 = vpop.f32.mrf.mxu0
        %v798 = vadd.f32 %v465, %v797
        %v799 = vpop.f32.mrf.mxu0
        %v800 = vadd.f32 %v465, %v799
        %v801 = vpop.f32.mrf.mxu0
        %v802 = vadd.f32 %v470, %v801
        %v803 = vpop.f32.mrf.mxu0
        %v804 = vadd.f32 %v470, %v803
        %805 = vmatprep.mubr.bf16.mxu0 0
        %806 = vmatmul.mubr.bf16.gmra.mxu0 %v670
        %v807 = vpop.f32.mrf.mxu0
        %v808 = vadd.f32 %v475, %v807
        %v809 = vpop.f32.mrf.mxu0
        %v810 = vadd.f32 %v475, %v809
        %v811 = vpop.f32.mrf.mxu0
        %v812 = vadd.f32 %v480, %v811
        %v813 = vpop.f32.mrf.mxu0
        %v814 = vadd.f32 %v480, %v813
        %815 = vmatprep.mubr.bf16.mxu0 0
        %816 = vmatmul.mubr.bf16.gmra.mxu0 %v673
        %v817 = vpop.f32.mrf.mxu0
        %v818 = vadd.f32 %v485, %v817
        %v819 = vpop.f32.mrf.mxu0
        %v820 = vadd.f32 %v485, %v819
        %v821 = vpop.f32.mrf.mxu0
        %v822 = vadd.f32 %v490, %v821
        %v823 = vpop.f32.mrf.mxu0
        %v824 = vadd.f32 %v490, %v823
        %825 = vmatprep.mubr.bf16.mxu0 0
        %826 = vmatmul.mubr.bf16.gmra.mxu0 %v676
        %v827 = vpop.f32.mrf.mxu0
        %v828 = vadd.f32 %v495, %v827
        %v829 = vpop.f32.mrf.mxu0
        %v830 = vadd.f32 %v495, %v829
        %v831 = vpop.f32.mrf.mxu0
        %v832 = vadd.f32 %v500, %v831
        %v833 = vpop.f32.mrf.mxu0
        %v834 = vadd.f32 %v500, %v833
        %835 = vmatprep.mubr.bf16.mxu0 0
        %836 = vmatmul.mubr.bf16.gmra.mxu0 %v679
        %v837 = vpop.f32.mrf.mxu0
        %v838 = vadd.f32 %v505, %v837
        %v839 = vpop.f32.mrf.mxu0
        %v840 = vadd.f32 %v505, %v839
        %v841 = vpop.f32.mrf.mxu0
        %v842 = vadd.f32 %v510, %v841
        %v843 = vpop.f32.mrf.mxu0
        %v844 = vadd.f32 %v510, %v843
        %845 = vmatprep.mubr.bf16.mxu0 0
        %846 = vmatmul.mubr.bf16.gmra.mxu0 %v682
        %v847 = vpop.f32.mrf.mxu0
        %v848 = vadd.f32 %v515, %v847
        %v849 = vpop.f32.mrf.mxu0
        %v850 = vadd.f32 %v515, %v849
        %v851 = vpop.f32.mrf.mxu0
        %v852 = vadd.f32 %v520, %v851
        %v853 = vpop.f32.mrf.mxu0
        %v854 = vadd.f32 %v520, %v853
        %855 = vmatprep.mubr.bf16.mxu0 0
        %856 = vmatmul.mubr.bf16.gmra.mxu0 %v685
        %v857 = vpop.f32.mrf.mxu0
        %v858 = vadd.f32 %v525, %v857
        %v859 = vpop.f32.mrf.mxu0
        %v860 = vadd.f32 %v525, %v859
        %v861 = vpop.f32.mrf.mxu0
        %v862 = vadd.f32 %v530, %v861
        %v863 = vpop.f32.mrf.mxu0
        %v864 = vadd.f32 %v530, %v863
        %865 = vmatprep.mubr.bf16.mxu0 0
        %866 = vmatmul.mubr.bf16.gmra.mxu0 %v688
        %v867 = vpop.f32.mrf.mxu0
        %v868 = vadd.f32 %v535, %v867
        %v869 = vpop.f32.mrf.mxu0
        %v870 = vadd.f32 %v535, %v869
        %v871 = vpop.f32.mrf.mxu0
        %v872 = vadd.f32 %v540, %v871
        %v873 = vpop.f32.mrf.mxu0
        %v874 = vadd.f32 %v540, %v873
        %875 = vmatprep.mubr.bf16.mxu0 0
        %876 = vmatmul.mubr.bf16.gmra.mxu0 %v691
        %v877 = vpop.f32.mrf.mxu0
        %v878 = vadd.f32 %v545, %v877
        %v879 = vpop.f32.mrf.mxu0
        %v880 = vadd.f32 %v545, %v879
        %v881 = vpop.f32.mrf.mxu0
        %v882 = vadd.f32 %v550, %v881
        %v883 = vpop.f32.mrf.mxu0
        %v884 = vadd.f32 %v550, %v883
        %885 = vmatprep.mubr.bf16.mxu0 0
        %886 = vmatmul.mubr.bf16.gmra.mxu0 %v694
        %v887 = vpop.f32.mrf.mxu0
        %v888 = vadd.f32 %v555, %v887
        %v889 = vpop.f32.mrf.mxu0
        %v890 = vadd.f32 %v555, %v889
        %v891 = vpop.f32.mrf.mxu0
        %v892 = vadd.f32 %v560, %v891
        %v893 = vpop.f32.mrf.mxu0
        %v894 = vadd.f32 %v560, %v893
        %895 = vdwg.mxu0
        %v896 = vmax.f32 %v738, 0.0
        %v897 = vmax.f32 %v740, 0.0
        %v898 = vmax.f32 %v742, 0.0
        %v899 = vmax.f32 %v744, 0.0
        %v900 = vmax.f32 %v748, 0.0
        %v901 = vmax.f32 %v750, 0.0
        %v902 = vmax.f32 %v752, 0.0
        %v903 = vmax.f32 %v754, 0.0
        %v904 = vmax.f32 %v758, 0.0
        %v905 = vmax.f32 %v760, 0.0
        %v906 = vmax.f32 %v762, 0.0
        %v907 = vmax.f32 %v764, 0.0
        %v908 = vmax.f32 %v768, 0.0
        %v909 = vmax.f32 %v770, 0.0
        %v910 = vmax.f32 %v772, 0.0
        %v911 = vmax.f32 %v774, 0.0
        %v912 = vmax.f32 %v778, 0.0
        %v913 = vmax.f32 %v780, 0.0
        %v914 = vmax.f32 %v782, 0.0
        %v915 = vmax.f32 %v784, 0.0
        %v916 = vmax.f32 %v788, 0.0
        %v917 = vmax.f32 %v790, 0.0
        %v918 = vmax.f32 %v792, 0.0
        %v919 = vmax.f32 %v794, 0.0
        %v920 = vmax.f32 %v798, 0.0
        %v921 = vmax.f32 %v800, 0.0
        %v922 = vmax.f32 %v802, 0.0
        %v923 = vmax.f32 %v804, 0.0
        %v924 = vmax.f32 %v808, 0.0
        %v925 = vmax.f32 %v810, 0.0
        %v926 = vmax.f32 %v812, 0.0
        %v927 = vmax.f32 %v814, 0.0
        %v928 = vmax.f32 %v818, 0.0
        %v929 = vmax.f32 %v820, 0.0
        %v930 = vmax.f32 %v822, 0.0
        %v931 = vmax.f32 %v824, 0.0
        %v932 = vmax.f32 %v828, 0.0
        %v933 = vmax.f32 %v830, 0.0
        %v934 = vmax.f32 %v832, 0.0
        %v935 = vmax.f32 %v834, 0.0
        %v936 = vmax.f32 %v838, 0.0
        %v937 = vmax.f32 %v840, 0.0
        %v938 = vmax.f32 %v842, 0.0
        %v939 = vmax.f32 %v844, 0.0
        %v940 = vmax.f32 %v848, 0.0
        %v941 = vmax.f32 %v850, 0.0
        %v942 = vmax.f32 %v852, 0.0
        %v943 = vmax.f32 %v854, 0.0
        %v944 = vmax.f32 %v858, 0.0
        %v945 = vmax.f32 %v860, 0.0
        %v946 = vmax.f32 %v862, 0.0
        %v947 = vmax.f32 %v864, 0.0
        %v948 = vmax.f32 %v868, 0.0
        %v949 = vmax.f32 %v870, 0.0
        %v950 = vmax.f32 %v872, 0.0
        %v951 = vmax.f32 %v874, 0.0
        %v952 = vmax.f32 %v878, 0.0
        %v953 = vmax.f32 %v880, 0.0
        %v954 = vmax.f32 %v882, 0.0
        %v955 = vmax.f32 %v884, 0.0
        %v956 = vmax.f32 %v888, 0.0
        %v957 = vmax.f32 %v890, 0.0
        %v958 = vmax.f32 %v892, 0.0
        %v959 = vmax.f32 %v894, 0.0
        %v960 = vpack.c.bf16 %v898, %v896
        %v961 = vpack.c.bf16 %v899, %v897
        %v962 = vpack.c.bf16 %v902, %v900
        %v963 = vpack.c.bf16 %v903, %v901
        %v964 = vpack.c.bf16 %v906, %v904
        %v965 = vpack.c.bf16 %v907, %v905
        %v966 = vpack.c.bf16 %v910, %v908
        %v967 = vpack.c.bf16 %v911, %v909
        %v968 = vpack.c.bf16 %v914, %v912
        %v969 = vpack.c.bf16 %v915, %v913
        %v970 = vpack.c.bf16 %v918, %v916
        %v971 = vpack.c.bf16 %v919, %v917
        %v972 = vpack.c.bf16 %v922, %v920
        %v973 = vpack.c.bf16 %v923, %v921
        %v974 = vpack.c.bf16 %v926, %v924
        %v975 = vpack.c.bf16 %v927, %v925
        %v976 = vpack.c.bf16 %v930, %v928
        %v977 = vpack.c.bf16 %v931, %v929
        %v978 = vpack.c.bf16 %v934, %v932
        %v979 = vpack.c.bf16 %v935, %v933
        %v980 = vpack.c.bf16 %v938, %v936
        %v981 = vpack.c.bf16 %v939, %v937
        %v982 = vpack.c.bf16 %v942, %v940
        %v983 = vpack.c.bf16 %v943, %v941
        %v984 = vpack.c.bf16 %v946, %v944
        %v985 = vpack.c.bf16 %v947, %v945
        %v986 = vpack.c.bf16 %v950, %v948
        %v987 = vpack.c.bf16 %v951, %v949
        %v988 = vpack.c.bf16 %v954, %v952
        %v989 = vpack.c.bf16 %v955, %v953
        %v990 = vpack.c.bf16 %v958, %v956
        %v991 = vpack.c.bf16 %v959, %v957
        %v992 = vld [vmem:[%s3] sm:$0xff]
        %v993 = vld [vmem:[%s3 + $0x8] sm:$0xff]
        %v994 = vld [vmem:[%s3 + $0x10] sm:$0xff]
        %v995 = vld [vmem:[%s3 + $0x18] sm:$0xff]
        %v996 = vld [vmem:[%s3 + $0x20] sm:$0xff]
        %v997 = vld [vmem:[%s3 + $0x28] sm:$0xff]
        %v998 = vld [vmem:[%s3 + $0x30] sm:$0xff]
        %v999 = vld [vmem:[%s3 + $0x38] sm:$0xff]
        %v1000 = vld [vmem:[%s3 + $0x40] sm:$0xff]
        %v1001 = vld [vmem:[%s3 + $0x48] sm:$0xff]
        %v1002 = vld [vmem:[%s3 + $0x50] sm:$0xff]
        %v1003 = vld [vmem:[%s3 + $0x58] sm:$0xff]
        %v1004 = vld [vmem:[%s3 + $0x60] sm:$0xff]
        %v1005 = vld [vmem:[%s3 + $0x68] sm:$0xff]
        %v1006 = vld [vmem:[%s3 + $0x70] sm:$0xff]
        %v1007 = vld [vmem:[%s3 + $0x78] sm:$0xff]
        %v1008 = vld [vmem:[%s4] sm:$0xff]
        %v1009 = vld [vmem:[%s4 + $0x8] sm:$0xff]
        %v1010 = vld [vmem:[%s4 + $0x10] sm:$0xff]
        %v1011 = vld [vmem:[%s4 + $0x18] sm:$0xff]
        %v1012 = vld [vmem:[%s4 + $0x20] sm:$0xff]
        %v1013 = vld [vmem:[%s4 + $0x28] sm:$0xff]
        %v1014 = vld [vmem:[%s4 + $0x30] sm:$0xff]
        %v1015 = vld [vmem:[%s4 + $0x38] sm:$0xff]
        %v1016 = vld [vmem:[%s4 + $0x40] sm:$0xff]
        %v1017 = vld [vmem:[%s4 + $0x48] sm:$0xff]
        %v1018 = vld [vmem:[%s4 + $0x50] sm:$0xff]
        %v1019 = vld [vmem:[%s4 + $0x58] sm:$0xff]
        %v1020 = vld [vmem:[%s4 + $0x60] sm:$0xff]
        %v1021 = vld [vmem:[%s4 + $0x68] sm:$0xff]
        %v1022 = vld [vmem:[%s4 + $0x70] sm:$0xff]
        %v1023 = vld [vmem:[%s4 + $0x78] sm:$0xff]
        %1025 = vset.pattern.permute.xlu0 0
        %1026 = vperm.xlu0 %1025, %v1008
        %v1027 = vpop.permute.xlu0 %1026
        %1030 = vset.pattern.permute.xlu0 0
        %1031 = vperm.xlu0 %1030, %v1009
        %v1032 = vpop.permute.xlu0 %1031
        %1035 = vset.pattern.permute.xlu0 0
        %1036 = vperm.xlu0 %1035, %v1010
        %v1037 = vpop.permute.xlu0 %1036
        %1040 = vset.pattern.permute.xlu0 0
        %1041 = vperm.xlu0 %1040, %v1011
        %v1042 = vpop.permute.xlu0 %1041
        %1045 = vset.pattern.permute.xlu0 0
        %1046 = vperm.xlu0 %1045, %v1012
        %v1047 = vpop.permute.xlu0 %1046
        %1050 = vset.pattern.permute.xlu0 0
        %1051 = vperm.xlu0 %1050, %v1013
        %v1052 = vpop.permute.xlu0 %1051
        %1055 = vset.pattern.permute.xlu0 0
        %1056 = vperm.xlu0 %1055, %v1014
        %v1057 = vpop.permute.xlu0 %1056
        %1060 = vset.pattern.permute.xlu0 0
        %1061 = vperm.xlu0 %1060, %v1015
        %v1062 = vpop.permute.xlu0 %1061
        %1065 = vset.pattern.permute.xlu0 0
        %1066 = vperm.xlu0 %1065, %v1016
        %v1067 = vpop.permute.xlu0 %1066
        %1070 = vset.pattern.permute.xlu0 0
        %1071 = vperm.xlu0 %1070, %v1017
        %v1072 = vpop.permute.xlu0 %1071
        %1075 = vset.pattern.permute.xlu0 0
        %1076 = vperm.xlu0 %1075, %v1018
        %v1077 = vpop.permute.xlu0 %1076
        %1080 = vset.pattern.permute.xlu0 0
        %1081 = vperm.xlu0 %1080, %v1019
        %v1082 = vpop.permute.xlu0 %1081
        %1085 = vset.pattern.permute.xlu0 0
        %1086 = vperm.xlu0 %1085, %v1020
        %v1087 = vpop.permute.xlu0 %1086
        %1090 = vset.pattern.permute.xlu0 0
        %1091 = vperm.xlu0 %1090, %v1021
        %v1092 = vpop.permute.xlu0 %1091
        %1095 = vset.pattern.permute.xlu0 0
        %1096 = vperm.xlu0 %1095, %v1022
        %v1097 = vpop.permute.xlu0 %1096
        %1100 = vset.pattern.permute.xlu0 0
        %1101 = vperm.xlu0 %1100, %v1023
        %v1102 = vpop.permute.xlu0 %1101
        %v1120 = vunpack.c.l.b16 %v992
        %v1121 = vunpack.c.h.b16 %v992
        %v1122 = vunpack.c.l.b16 %v993
        %v1123 = vunpack.c.h.b16 %v993
        %v1124 = vunpack.c.l.b16 %v994
        %v1125 = vunpack.c.h.b16 %v994
        %v1126 = vunpack.c.l.b16 %v995
        %v1127 = vunpack.c.h.b16 %v995
        %v1128 = vunpack.c.l.b16 %v996
        %v1129 = vunpack.c.h.b16 %v996
        %v1130 = vunpack.c.l.b16 %v997
        %v1131 = vunpack.c.h.b16 %v997
        %v1132 = vunpack.c.l.b16 %v998
        %v1133 = vunpack.c.h.b16 %v998
        %v1134 = vunpack.c.l.b16 %v999
        %v1135 = vunpack.c.h.b16 %v999
        %v1136 = vunpack.c.l.b16 %v1000
        %v1137 = vunpack.c.h.b16 %v1000
        %v1138 = vunpack.c.l.b16 %v1001
        %v1139 = vunpack.c.h.b16 %v1001
        %v1140 = vunpack.c.l.b16 %v1002
        %v1141 = vunpack.c.h.b16 %v1002
        %v1142 = vunpack.c.l.b16 %v1003
        %v1143 = vunpack.c.h.b16 %v1003
        %v1144 = vunpack.c.l.b16 %v1004
        %v1145 = vunpack.c.h.b16 %v1004
        %v1146 = vunpack.c.l.b16 %v1005
        %v1147 = vunpack.c.h.b16 %v1005
        %v1148 = vunpack.c.l.b16 %v1006
        %v1149 = vunpack.c.h.b16 %v1006
        %v1150 = vunpack.c.l.b16 %v1007
        %v1151 = vunpack.c.h.b16 %v1007
        %v1152 = vpack.c.b16 %v1122, %v1120
        %v1153 = vpack.c.b16 %v1123, %v1121
        %v1154 = vpack.c.b16 %v1126, %v1124
        %v1155 = vpack.c.b16 %v1127, %v1125
        %v1156 = vpack.c.b16 %v1130, %v1128
        %v1157 = vpack.c.b16 %v1131, %v1129
        %v1158 = vpack.c.b16 %v1134, %v1132
        %v1159 = vpack.c.b16 %v1135, %v1133
        %v1160 = vpack.c.b16 %v1138, %v1136
        %v1161 = vpack.c.b16 %v1139, %v1137
        %v1162 = vpack.c.b16 %v1142, %v1140
        %v1163 = vpack.c.b16 %v1143, %v1141
        %v1164 = vpack.c.b16 %v1146, %v1144
        %v1165 = vpack.c.b16 %v1147, %v1145
        %v1166 = vpack.c.b16 %v1150, %v1148
        %v1167 = vpack.c.b16 %v1151, %v1149
        %1184 = vmatprep.subr.bf16.mxu0 %v975
        %1185 = vmatpush1.bf16.msra.mxu0 %v974
        %1186 = vmatprep.subr.bf16.mxu0 %v973
        %1187 = vmatpush1.bf16.msra.mxu0 %v972
        %1188 = vmatprep.subr.bf16.mxu0 %v971
        %1189 = vmatpush1.bf16.msra.mxu0 %v970
        %1190 = vmatprep.subr.bf16.mxu0 %v969
        %1191 = vmatpush1.bf16.msra.mxu0 %v968
        %1192 = vmatprep.subr.bf16.mxu0 %v967
        %1193 = vmatpush1.bf16.msra.mxu0 %v966
        %1194 = vmatprep.subr.bf16.mxu0 %v965
        %1195 = vmatpush1.bf16.msra.mxu0 %v964
        %1196 = vmatprep.subr.bf16.mxu0 %v963
        %1197 = vmatpush1.bf16.msra.mxu0 %v962
        %1198 = vmatprep.subr.bf16.mxu0 %v961
        %1199 = vmatpush1.bf16.msra.mxu0 %v960
        %1200 = vmatprep.subr.bf16.mxu0 %v991
        %1201 = vmatpush2.bf16.msra.mxu0 %v990
        %1202 = vmatprep.subr.bf16.mxu0 %v989
        %1203 = vmatpush2.bf16.msra.mxu0 %v988
        %1204 = vmatprep.subr.bf16.mxu0 %v987
        %1205 = vmatpush2.bf16.msra.mxu0 %v986
        %1206 = vmatprep.subr.bf16.mxu0 %v985
        %1207 = vmatpush2.bf16.msra.mxu0 %v984
        %1208 = vmatprep.subr.bf16.mxu0 %v983
        %1209 = vmatpush2.bf16.msra.mxu0 %v982
        %1210 = vmatprep.subr.bf16.mxu0 %v981
        %1211 = vmatpush2.bf16.msra.mxu0 %v980
        %1212 = vmatprep.subr.bf16.mxu0 %v979
        %1213 = vmatpush2.bf16.msra.mxu0 %v978
        %1214 = vmatprep.subr.bf16.mxu0 %v977
        %1215 = vmatpush2.bf16.msra.mxu0 %v976
        %1216 = vmatprep.mubr.bf16.mxu0 %v1153
        %1217 = vmatmul.mubr.bf16.gmra.mxu0 %v1152
        %v1218 = vpop.f32.mrf.mxu0
        %v1219 = vadd.f32 %v1027, %v1218
        %v1220 = vpop.f32.mrf.mxu0
        %v1221 = vadd.f32 %v1027, %v1220
        %v1222 = vpop.f32.mrf.mxu0
        %v1223 = vadd.f32 %v1032, %v1222
        %v1224 = vpop.f32.mrf.mxu0
        %v1225 = vadd.f32 %v1032, %v1224
        %1226 = vmatprep.mubr.bf16.mxu0 %v1155
        %1227 = vmatmul.mubr.bf16.gmra.mxu0 %v1154
        %v1228 = vpop.f32.mrf.mxu0
        %v1229 = vadd.f32 %v1037, %v1228
        %v1230 = vpop.f32.mrf.mxu0
        %v1231 = vadd.f32 %v1037, %v1230
        %v1232 = vpop.f32.mrf.mxu0
        %v1233 = vadd.f32 %v1042, %v1232
        %v1234 = vpop.f32.mrf.mxu0
        %v1235 = vadd.f32 %v1042, %v1234
        %1236 = vmatprep.mubr.bf16.mxu0 %v1157
        %1237 = vmatmul.mubr.bf16.gmra.mxu0 %v1156
        %v1238 = vpop.f32.mrf.mxu0
        %v1239 = vadd.f32 %v1047, %v1238
        %v1240 = vpop.f32.mrf.mxu0
        %v1241 = vadd.f32 %v1047, %v1240
        %v1242 = vpop.f32.mrf.mxu0
        %v1243 = vadd.f32 %v1052, %v1242
        %v1244 = vpop.f32.mrf.mxu0
        %v1245 = vadd.f32 %v1052, %v1244
        %1246 = vmatprep.mubr.bf16.mxu0 %v1159
        %1247 = vmatmul.mubr.bf16.gmra.mxu0 %v1158
        %v1248 = vpop.f32.mrf.mxu0
        %v1249 = vadd.f32 %v1057, %v1248
        %v1250 = vpop.f32.mrf.mxu0
        %v1251 = vadd.f32 %v1057, %v1250
        %v1252 = vpop.f32.mrf.mxu0
        %v1253 = vadd.f32 %v1062, %v1252
        %v1254 = vpop.f32.mrf.mxu0
        %v1255 = vadd.f32 %v1062, %v1254
        %1256 = vmatprep.mubr.bf16.mxu0 %v1161
        %1257 = vmatmul.mubr.bf16.gmra.mxu0 %v1160
        %v1258 = vpop.f32.mrf.mxu0
        %v1259 = vadd.f32 %v1067, %v1258
        %v1260 = vpop.f32.mrf.mxu0
        %v1261 = vadd.f32 %v1067, %v1260
        %v1262 = vpop.f32.mrf.mxu0
        %v1263 = vadd.f32 %v1072, %v1262
        %v1264 = vpop.f32.mrf.mxu0
        %v1265 = vadd.f32 %v1072, %v1264
        %1266 = vmatprep.mubr.bf16.mxu0 %v1163
        %1267 = vmatmul.mubr.bf16.gmra.mxu0 %v1162
        %v1268 = vpop.f32.mrf.mxu0
        %v1269 = vadd.f32 %v1077, %v1268
        %v1270 = vpop.f32.mrf.mxu0
        %v1271 = vadd.f32 %v1077, %v1270
        %v1272 = vpop.f32.mrf.mxu0
        %v1273 = vadd.f32 %v1082, %v1272
        %v1274 = vpop.f32.mrf.mxu0
        %v1275 = vadd.f32 %v1082, %v1274
        %1276 = vmatprep.mubr.bf16.mxu0 %v1165
        %1277 = vmatmul.mubr.bf16.gmra.mxu0 %v1164
        %v1278 = vpop.f32.mrf.mxu0
        %v1279 = vadd.f32 %v1087, %v1278
        %v1280 = vpop.f32.mrf.mxu0
        %v1281 = vadd.f32 %v1087, %v1280
        %v1282 = vpop.f32.mrf.mxu0
        %v1283 = vadd.f32 %v1092, %v1282
        %v1284 = vpop.f32.mrf.mxu0
        %v1285 = vadd.f32 %v1092, %v1284
        %1286 = vmatprep.mubr.bf16.mxu0 %v1167
        %1287 = vmatmul.mubr.bf16.gmra.mxu0 %v1166
        %v1288 = vpop.f32.mrf.mxu0
        %v1289 = vadd.f32 %v1097, %v1288
        %v1290 = vpop.f32.mrf.mxu0
        %v1291 = vadd.f32 %v1097, %v1290
        %v1292 = vpop.f32.mrf.mxu0
        %v1293 = vadd.f32 %v1102, %v1292
        %v1294 = vpop.f32.mrf.mxu0
        %v1295 = vadd.f32 %v1102, %v1294
        %1296 = vdwg.mxu0
        %v1297 = vmax.f32 %v1219, 0.0
        %v1298 = vmax.f32 %v1221, 0.0
        %v1299 = vmax.f32 %v1223, 0.0
        %v1300 = vmax.f32 %v1225, 0.0
        %v1301 = vmax.f32 %v1229, 0.0
        %v1302 = vmax.f32 %v1231, 0.0
        %v1303 = vmax.f32 %v1233, 0.0
        %v1304 = vmax.f32 %v1235, 0.0
        %v1305 = vmax.f32 %v1239, 0.0
        %v1306 = vmax.f32 %v1241, 0.0
        %v1307 = vmax.f32 %v1243, 0.0
        %v1308 = vmax.f32 %v1245, 0.0
        %v1309 = vmax.f32 %v1249, 0.0
        %v1310 = vmax.f32 %v1251, 0.0
        %v1311 = vmax.f32 %v1253, 0.0
        %v1312 = vmax.f32 %v1255, 0.0
        %v1313 = vmax.f32 %v1259, 0.0
        %v1314 = vmax.f32 %v1261, 0.0
        %v1315 = vmax.f32 %v1263, 0.0
        %v1316 = vmax.f32 %v1265, 0.0
        %v1317 = vmax.f32 %v1269, 0.0
        %v1318 = vmax.f32 %v1271, 0.0
        %v1319 = vmax.f32 %v1273, 0.0
        %v1320 = vmax.f32 %v1275, 0.0
        %v1321 = vmax.f32 %v1279, 0.0
        %v1322 = vmax.f32 %v1281, 0.0
        %v1323 = vmax.f32 %v1283, 0.0
        %v1324 = vmax.f32 %v1285, 0.0
        %v1325 = vmax.f32 %v1289, 0.0
        %v1326 = vmax.f32 %v1291, 0.0
        %v1327 = vmax.f32 %v1293, 0.0
        %v1328 = vmax.f32 %v1295, 0.0
        %v1329 = vpack.c.bf16 %v1299, %v1297
        %v1330 = vpack.c.bf16 %v1300, %v1298
        %v1331 = vpack.c.bf16 %v1303, %v1301
        %v1332 = vpack.c.bf16 %v1304, %v1302
        %v1333 = vpack.c.bf16 %v1307, %v1305
        %v1334 = vpack.c.bf16 %v1308, %v1306
        %v1335 = vpack.c.bf16 %v1311, %v1309
        %v1336 = vpack.c.bf16 %v1312, %v1310
        %v1337 = vpack.c.bf16 %v1315, %v1313
        %v1338 = vpack.c.bf16 %v1316, %v1314
        %v1339 = vpack.c.bf16 %v1319, %v1317
        %v1340 = vpack.c.bf16 %v1320, %v1318
        %v1341 = vpack.c.bf16 %v1323, %v1321
        %v1342 = vpack.c.bf16 %v1324, %v1322
        %v1343 = vpack.c.bf16 %v1327, %v1325
        %v1344 = vpack.c.bf16 %v1328, %v1326
        %v1345 = vld [vmem:[%s5] sm:$0xf]
        %v1346 = vld [vmem:[%s5 + $0x4] sm:$0xf]
        %v1347 = vld [vmem:[%s5 + $0x8] sm:$0xf]
        %v1348 = vld [vmem:[%s5 + $0xc] sm:$0xf]
        %v1349 = vld [vmem:[%s5 + $0x10] sm:$0xf]
        %v1350 = vld [vmem:[%s5 + $0x14] sm:$0xf]
        %v1351 = vld [vmem:[%s5 + $0x18] sm:$0xf]
        %v1352 = vld [vmem:[%s5 + $0x1c] sm:$0xf]
        %v1353 = vld [vmem:[%s6] sm:$0xff]
        %v1354 = vld [vmem:[%s6 + $0x8] sm:$0xff]
        %v1355 = vld [vmem:[%s6 + $0x10] sm:$0xff]
        %v1356 = vld [vmem:[%s6 + $0x18] sm:$0xff]
        %v1357 = vld [vmem:[%s6 + $0x20] sm:$0xff]
        %v1358 = vld [vmem:[%s6 + $0x28] sm:$0xff]
        %v1359 = vld [vmem:[%s6 + $0x30] sm:$0xff]
        %v1360 = vld [vmem:[%s6 + $0x38] sm:$0xff]
        %1362 = vset.pattern.permute.xlu0 0
        %1363 = vperm.xlu0 %1362, %v1353
        %v1364 = vpop.permute.xlu0 %1363
        %1367 = vset.pattern.permute.xlu0 0
        %1368 = vperm.xlu0 %1367, %v1354
        %v1369 = vpop.permute.xlu0 %1368
        %1372 = vset.pattern.permute.xlu0 0
        %1373 = vperm.xlu0 %1372, %v1355
        %v1374 = vpop.permute.xlu0 %1373
        %1377 = vset.pattern.permute.xlu0 0
        %1378 = vperm.xlu0 %1377, %v1356
        %v1379 = vpop.permute.xlu0 %1378
        %1382 = vset.pattern.permute.xlu0 0
        %1383 = vperm.xlu0 %1382, %v1357
        %v1384 = vpop.permute.xlu0 %1383
        %1387 = vset.pattern.permute.xlu0 0
        %1388 = vperm.xlu0 %1387, %v1358
        %v1389 = vpop.permute.xlu0 %1388
        %1392 = vset.pattern.permute.xlu0 0
        %1393 = vperm.xlu0 %1392, %v1359
        %v1394 = vpop.permute.xlu0 %1393
        %1397 = vset.pattern.permute.xlu0 0
        %1398 = vperm.xlu0 %1397, %v1360
        %v1399 = vpop.permute.xlu0 %1398
        %v1409 = vunpack.c.l.b16 %v1345
        %v1410 = vunpack.c.l.b16 %v1346
        %v1411 = vunpack.c.l.b16 %v1347
        %v1412 = vunpack.c.l.b16 %v1348
        %v1413 = vunpack.c.l.b16 %v1349
        %v1414 = vunpack.c.l.b16 %v1350
        %v1415 = vunpack.c.l.b16 %v1351
        %v1416 = vunpack.c.l.b16 %v1352
        %v1417 = vpack.c.b16 %v1410, %v1409
        %v1418 = vpack.c.b16 %v1412, %v1411
        %v1419 = vpack.c.b16 %v1414, %v1413
        %v1420 = vpack.c.b16 %v1416, %v1415
        %1425 = vmatprep.subr.bf16.mxu0 %v1344
        %1426 = vmatpush1.bf16.msra.mxu0 %v1343
        %1427 = vmatprep.subr.bf16.mxu0 %v1342
        %1428 = vmatpush1.bf16.msra.mxu0 %v1341
        %1429 = vmatprep.subr.bf16.mxu0 %v1340
        %1430 = vmatpush1.bf16.msra.mxu0 %v1339
        %1431 = vmatprep.subr.bf16.mxu0 %v1338
        %1432 = vmatpush1.bf16.msra.mxu0 %v1337
        %1433 = vmatprep.subr.bf16.mxu0 %v1336
        %1434 = vmatpush1.bf16.msra.mxu0 %v1335
        %1435 = vmatprep.subr.bf16.mxu0 %v1334
        %1436 = vmatpush1.bf16.msra.mxu0 %v1333
        %1437 = vmatprep.subr.bf16.mxu0 %v1332
        %1438 = vmatpush1.bf16.msra.mxu0 %v1331
        %1439 = vmatprep.subr.bf16.mxu0 %v1330
        %1440 = vmatpush1.bf16.msra.mxu0 %v1329
        %1441 = vmatprep.subr.bf16.mxu0 0
        %1442 = vmatpush2.bf16.msra.mxu0 0
        %1443 = vmatprep.subr.bf16.mxu0 0
        %1444 = vmatpush2.bf16.msra.mxu0 0
        %1445 = vmatprep.subr.bf16.mxu0 0
        %1446 = vmatpush2.bf16.msra.mxu0 0
        %1447 = vmatprep.subr.bf16.mxu0 0
        %1448 = vmatpush2.bf16.msra.mxu0 0
        %1449 = vmatprep.subr.bf16.mxu0 0
        %1450 = vmatpush2.bf16.msra.mxu0 0
        %1451 = vmatprep.subr.bf16.mxu0 0
        %1452 = vmatpush2.bf16.msra.mxu0 0
        %1453 = vmatprep.subr.bf16.mxu0 0
        %1454 = vmatpush2.bf16.msra.mxu0 0
        %1455 = vmatprep.subr.bf16.mxu0 0
        %1456 = vmatpush2.bf16.msra.mxu0 0
        %1457 = vmatprep.mubr.bf16.mxu0 0
        %1458 = vmatmul.mubr.bf16.gmra.mxu0 %v1417
        %v1459 = vpop.f32.mrf.mxu0
        %v1460 = vadd.f32 %v1364, %v1459
        %v1461 = vpop.f32.mrf.mxu0
        %v1462 = vadd.f32 %v1364, %v1461
        %v1463 = vpop.f32.mrf.mxu0
        %v1464 = vadd.f32 %v1369, %v1463
        %v1465 = vpop.f32.mrf.mxu0
        %v1466 = vadd.f32 %v1369, %v1465
        %1467 = vmatprep.mubr.bf16.mxu0 0
        %1468 = vmatmul.mubr.bf16.gmra.mxu0 %v1418
        %v1469 = vpop.f32.mrf.mxu0
        %v1470 = vadd.f32 %v1374, %v1469
        %v1471 = vpop.f32.mrf.mxu0
        %v1472 = vadd.f32 %v1374, %v1471
        %v1473 = vpop.f32.mrf.mxu0
        %v1474 = vadd.f32 %v1379, %v1473
        %v1475 = vpop.f32.mrf.mxu0
        %v1476 = vadd.f32 %v1379, %v1475
        %1477 = vmatprep.mubr.bf16.mxu0 0
        %1478 = vmatmul.mubr.bf16.gmra.mxu0 %v1419
        %v1479 = vpop.f32.mrf.mxu0
        %v1480 = vadd.f32 %v1384, %v1479
        %v1481 = vpop.f32.mrf.mxu0
        %v1482 = vadd.f32 %v1384, %v1481
        %v1483 = vpop.f32.mrf.mxu0
        %v1484 = vadd.f32 %v1389, %v1483
        %v1485 = vpop.f32.mrf.mxu0
        %v1486 = vadd.f32 %v1389, %v1485
        %1487 = vmatprep.mubr.bf16.mxu0 0
        %1488 = vmatmul.mubr.bf16.gmra.mxu0 %v1420
        %v1489 = vpop.f32.mrf.mxu0
        %v1490 = vadd.f32 %v1394, %v1489
        %v1491 = vpop.f32.mrf.mxu0
        %v1492 = vadd.f32 %v1394, %v1491
        %v1493 = vpop.f32.mrf.mxu0
        %v1494 = vadd.f32 %v1399, %v1493
        %v1495 = vpop.f32.mrf.mxu0
        %v1496 = vadd.f32 %v1399, %v1495
        %1497 = vdwg.mxu0
        %v1498 = vmax.f32 %v1460, 0.0
        %v1499 = vmax.f32 %v1462, 0.0
        %v1500 = vmax.f32 %v1464, 0.0
        %v1501 = vmax.f32 %v1466, 0.0
        %v1502 = vmax.f32 %v1470, 0.0
        %v1503 = vmax.f32 %v1472, 0.0
        %v1504 = vmax.f32 %v1474, 0.0
        %v1505 = vmax.f32 %v1476, 0.0
        %v1506 = vmax.f32 %v1480, 0.0
        %v1507 = vmax.f32 %v1482, 0.0
        %v1508 = vmax.f32 %v1484, 0.0
        %v1509 = vmax.f32 %v1486, 0.0
        %v1510 = vmax.f32 %v1490, 0.0
        %v1511 = vmax.f32 %v1492, 0.0
        %v1512 = vmax.f32 %v1494, 0.0
        %v1513 = vmax.f32 %v1496, 0.0
        %v1514 = vld [vmem:[%s7] sm:$0xff]
        %v1515 = vld [vmem:[%s7 + $0x8] sm:$0xff]
        %v1516 = vld [vmem:[%s7 + $0x10] sm:$0xff]
        %v1517 = vld [vmem:[%s7 + $0x18] sm:$0xff]
        %v1518 = vld [vmem:[%s7 + $0x20] sm:$0xff]
        %v1519 = vld [vmem:[%s7 + $0x28] sm:$0xff]
        %v1520 = vld [vmem:[%s7 + $0x30] sm:$0xff]
        %v1521 = vld [vmem:[%s7 + $0x38] sm:$0xff]
        %1523 = vset.pattern.permute.xlu0 0
        %1524 = vperm.xlu0 %1523, %v1514
        %v1525 = vpop.permute.xlu0 %1524
        %1528 = vset.pattern.permute.xlu0 0
        %1529 = vperm.xlu0 %1528, %v1515
        %v1530 = vpop.permute.xlu0 %1529
        %1533 = vset.pattern.permute.xlu0 0
        %1534 = vperm.xlu0 %1533, %v1516
        %v1535 = vpop.permute.xlu0 %1534
        %1538 = vset.pattern.permute.xlu0 0
        %1539 = vperm.xlu0 %1538, %v1517
        %v1540 = vpop.permute.xlu0 %1539
        %1543 = vset.pattern.permute.xlu0 0
        %1544 = vperm.xlu0 %1543, %v1518
        %v1545 = vpop.permute.xlu0 %1544
        %1548 = vset.pattern.permute.xlu0 0
        %1549 = vperm.xlu0 %1548, %v1519
        %v1550 = vpop.permute.xlu0 %1549
        %1553 = vset.pattern.permute.xlu0 0
        %1554 = vperm.xlu0 %1553, %v1520
        %v1555 = vpop.permute.xlu0 %1554
        %1558 = vset.pattern.permute.xlu0 0
        %1559 = vperm.xlu0 %1558, %v1521
        %v1560 = vpop.permute.xlu0 %1559
        %v1562 = vmul.f32 %v1498, %v1525
        %v1563 = vmul.f32 %v1499, %v1525
        %v1564 = vmul.f32 %v1500, %v1530
        %v1565 = vmul.f32 %v1501, %v1530
        %v1566 = vmul.f32 %v1502, %v1535
        %v1567 = vmul.f32 %v1503, %v1535
        %v1568 = vmul.f32 %v1504, %v1540
        %v1569 = vmul.f32 %v1505, %v1540
        %v1570 = vmul.f32 %v1506, %v1545
        %v1571 = vmul.f32 %v1507, %v1545
        %v1572 = vmul.f32 %v1508, %v1550
        %v1573 = vmul.f32 %v1509, %v1550
        %v1574 = vmul.f32 %v1510, %v1555
        %v1575 = vmul.f32 %v1511, %v1555
        %v1576 = vmul.f32 %v1512, %v1560
        %v1577 = vmul.f32 %v1513, %v1560
        %v1578 = vadd.f32 %v1562, %v1564
        %v1579 = vadd.f32 %v1578, %v1566
        %v1580 = vadd.f32 %v1579, %v1568
        %v1581 = vadd.f32 %v1580, %v1570
        %v1582 = vadd.f32 %v1581, %v1572
        %v1583 = vadd.f32 %v1582, %v1574
        %v1584 = vadd.f32 %v1583, %v1576
        %v1585 = vrot.slane %v1584, 4
        %v1586 = vadd.f32 %v1584, %v1585
        %v1587 = vrot.slane %v1586, 2
        %v1588 = vadd.f32 %v1586, %v1587
        %v1589 = vrot.slane %v1588, 1
        %v1590 = vadd.f32 %v1588, %v1589
        %v1591 = vadd.f32 %v1563, %v1565
        %v1592 = vadd.f32 %v1591, %v1567
        %v1593 = vadd.f32 %v1592, %v1569
        %v1594 = vadd.f32 %v1593, %v1571
        %v1595 = vadd.f32 %v1594, %v1573
        %v1596 = vadd.f32 %v1595, %v1575
        %v1597 = vadd.f32 %v1596, %v1577
        %v1598 = vrot.slane %v1597, 4
        %v1599 = vadd.f32 %v1597, %v1598
        %v1600 = vrot.slane %v1599, 2
        %v1601 = vadd.f32 %v1599, %v1600
        %v1602 = vrot.slane %v1601, 1
        %v1603 = vadd.f32 %v1601, %v1602
        %v1604 = vld [vmem:[#allocation2] sm:$0x1]
        %1606 = vset.pattern.permute.xlu0 0
        %1607 = vperm.xlu0 %1606, %v1604
        %v1608 = vpop.permute.xlu0 %1607
        %v1610 = vlaneseq
        %v1611 = vshrl.u32 %v1610, 7
        %v1612 = vsub.s32 0, %v1611
        %v1613 = vrot.slane %v1608, %v1612
        %v1614 = vadd.f32 %v1590, %v1613
        %v1615 = vadd.f32 %v1603, %v1613
        %v1616 = vtanh.pop %v1614
        %v1617 = vtanh.pop %v1615
        %v1618 = vmul.f32 %v1616, 0.5
        %v1619 = vmul.f32 %v1617, 0.5
        %v1620 = vadd.f32 %v1618, 0.5
        %v1621 = vadd.f32 %v1619, 0.5
        %v1624 = vcombine.low %v1620, %v1621
        %v1626 = vunpack.c.l.s4 1966171168
        %v1627 = vunpack.c.0.s8 %v1626
        %v1628 = vlaneseq
        %v1629 = vshrl.u32 %v1628, 7
        %v1630 = vsub.s32 %v1627, %v1629
        %v1631 = vrot.slane %v1624, %v1630
        %v1633 = vunpack.c.l.s4 1966171168
        %v1634 = vunpack.c.0.s8 %v1633
        %v1635 = vlaneseq
        %v1636 = vshrl.u32 %v1635, 7
        %v1637 = vsub.s32 %v1634, %v1636
        %v1638 = vrot.slane %v1631, %v1637
        %v1640 = vlaneseq
        %vm1641 = vcmp.ge.s32.totalorder %v1640, 0
        %vm1642 = vcmp.lt.s32.totalorder %v1640, 256
        %vm1643 = vmand %vm1641, %vm1642
        %1644 = vst.msk [vmem:[%s328] sm:$0x3] %vm1643, %v1638
        %s1645 = sand.u32 %s227, 1
        %s1646 = scalar_lea.sflag [#allocation4], %s1645
        %s1647 = sand.u32 %s227, 1
        %s1648 = smul.addr %s1647, 2
        %s1649 = scalar_lea.vmem [#allocation3], %s1648
        // Predicated region
        $region57: #{tpu_custom_call.1} parent=55 // pred_check
          %p1650 = pneg %p237
        $region58: #{tpu_custom_call.1} parent=55 // pred_check_branch
          %1652 = sbr.rel (%p1650) target = $region60
        $region59: #{tpu_custom_call.1} parent=55 // pred_region
          %s1653 = smul.u32 2, %s25
          %s1655 = ssub.s32 32, 32
          %1656 = vsyncadd %s1646, %s1655
          %s1657 = smul.addr %s1653, 16
          %s1658 = scalar_lea.hbm %s9, %s1657
          %s1660 = sshll.u32 %s1649, 4
          %s1661 = int_to_ptr.vmem [resolvable:$true] %s1660
          %1663 = dma.vmem_to_hbm [thread:$0]  %s1661, 32, %s1658, %s1646
        $region60: #{tpu_custom_call.1} parent=55 // pred_fallthru
          _
      $region56: #{tpu_custom_call.1} parent=5 // pred_fallthru
        _
      %p1664 = scmp.le.s32.totalorder 2, %s20
      // Predicated region
      $region61: #{tpu_custom_call.1} parent=5 // pred_check
        %p1665 = pneg %p1664
      $region62: #{tpu_custom_call.1} parent=5 // pred_check_branch
        %1667 = sbr.rel (%p1665) target = $region64
      $region63: #{tpu_custom_call.1} parent=5 // pred_region
        %s1668 = ssub.s32 %s20, 2
        // Predicated region
        $region65: #{tpu_custom_call.1} parent=63 // pred_check
          %p1669 = pneg %p243
        $region66: #{tpu_custom_call.1} parent=63 // pred_check_branch
          %1671 = sbr.rel (%p1669) target = $region68
        $region67: #{tpu_custom_call.1} parent=63 // pred_region
          %s1672 = sand.u32 %s228, 1
          %s1673 = scalar_lea.sflag [#allocation4], %s1672
          %s1674 = sand.u32 %s228, 1
          %s1675 = smul.addr %s1674, 2
          %s1676 = scalar_lea.vmem [#allocation3], %s1675
          %1677 = dma.done %s1673, 32
        $region68: #{tpu_custom_call.1} parent=63 // pred_fallthru
          _
      $region64: #{tpu_custom_call.1} parent=5 // pred_fallthru
        _
    $region6: #{tpu_custom_call.1} parent=1 // loop_footer
      %s24 = sadd.s32 1, %s20
    $region7: #{tpu_custom_call.1} parent=1 // loop_footer_branch
      %19 = sbr.rel target = $region3
    $region8: #{tpu_custom_call.1} parent=1 // loop_exit
      _
    %1678 = vsyncpa [#allocation4], 1
    %s1679 = scalar_lea.sflag [#allocation4], 1
    %1680 = vsyncpa %s1679, 1

</llo_original>
